<compile_context>
chip_gen: v7x
topology: tpu7x:2x2x1
jax: 0.10.0
libtpu: 0.0.40
codegen_flags: <defaults>
</compile_context>

<pallas_src>
import functools

import jax
import jax.numpy as jnp
from jax.experimental import pallas as pl
from jax.experimental.pallas import tpu as pltpu


def _inverted_residual_kernel(x_ref, w1_ref, b1_ref,
                              wdw_ref, b2_ref,
                              w3_ref, b3_ref,
                              o_ref, pad_ref,
                              *, H, W, cin, cmid_p, cout,
                              dilation, stride, use_res):
    d = dilation
    Hp, Wp = H + 2 * d, W + 2 * d

    x = x_ref[0]                                     # (H, W, Cin) bf16
    xm = x.reshape(H * W, cin)

    # ---- 1x1 expand conv (BN scale folded into w1) + bias + ReLU ----
    h1 = jnp.dot(xm, w1_ref[...], preferred_element_type=jnp.float32)
    h1 = jnp.maximum(h1 + b1_ref[0], 0.0)            # (H*W, Cmid_p) f32

    # ---- zero only the d-wide halo ring, then write the interior ----
    pad_ref[0:d, :, :] = jnp.zeros((d, Wp, cmid_p), jnp.float32)
    pad_ref[d + H:Hp, :, :] = jnp.zeros((d, Wp, cmid_p), jnp.float32)
    pad_ref[d:d + H, 0:d, :] = jnp.zeros((H, d, cmid_p), jnp.float32)
    pad_ref[d:d + H, d + W:Wp, :] = jnp.zeros((H, d, cmid_p), jnp.float32)
    pad_ref[d:d + H, d:d + W, :] = h1.reshape(H, W, cmid_p)

    # ---- 3x3 depthwise conv (stride-1, dilation d; BN scale folded) ----
    wdw = wdw_ref[...]                               # (9, Cmid_p) f32
    acc = pad_ref[0:H, 0:W, :] * wdw[0]              # tap (ky=0, kx=0)
    for idx in range(1, 9):
        ky, kx = divmod(idx, 3)
        tap = pad_ref[ky * d: ky * d + H, kx * d: kx * d + W, :]
        acc = acc + tap * wdw[idx]
    h2 = jnp.maximum(acc + b2_ref[0], 0.0)           # (H, W, Cmid_p) f32

    # ---- in-kernel row subsample for stride=2 (free outer-dim reshape) ----
    if stride == 2:
        rows = H // 2
        h2 = h2.reshape(rows, 2, W, cmid_p)[:, 0]    # keep rows 0,2,4,...
    else:
        rows = H

    # ---- 1x1 project conv (BN scale folded) + bias (+ residual) ----
    out = jnp.dot(h2.reshape(rows * W, cmid_p).astype(jnp.bfloat16),
                  w3_ref[...], preferred_element_type=jnp.float32)
    out = out + b3_ref[0]
    if use_res:
        out = out + xm.astype(jnp.float32)
    o_ref[0] = out.reshape(rows, W, cout).astype(o_ref.dtype)


@functools.partial(jax.jit, static_argnames=("stride", "dilation"))
def inverted_residual(x_nchw, params, *, stride, dilation=1):
    """NCHW in -> NCHW out, same semantics as the PyTorch module (eval BN)."""
    assert stride in (1, 2)
    N, cin, H, W = x_nchw.shape
    if stride == 2:
        assert H % 2 == 0, "stride=2 path currently requires even H"

    # ---- host-side param prep: fold BN scales, pad cmid to lane width ----
    w1 = params["w1_t"][:, :, 0, 0].T                           # (Cin, Cmid)
    wdw = params["wdw_t"][:, 0, :, :].reshape(-1, 9).T          # (9,  Cmid)
    w3 = params["w3_t"][:, :, 0, 0].T                           # (Cmid, Cout)
    cmid, cout = w1.shape[1], w3.shape[1]

    s1, b1 = params["s1"], params["b1"]
    s2, b2 = params["s2"], params["b2"]
    s3, b3 = params["s3"], params["b3"]

    w1 = w1 * s1[None, :]                 # fold BN1 scale into expand conv
    wdw = wdw * s2[None, :]               # fold BN2 scale into depthwise conv
    w3 = w3 * s3[None, :]                 # fold BN3 scale into project conv

    cmid_p = ((cmid + 127) // 128) * 128  # lane-dense intermediates
    pad_c = cmid_p - cmid
    w1p = jnp.pad(w1, ((0, 0), (0, pad_c))).astype(jnp.bfloat16)
    wdwp = jnp.pad(wdw, ((0, 0), (0, pad_c))).astype(jnp.float32)
    w3p = jnp.pad(w3, ((0, pad_c), (0, 0))).astype(jnp.bfloat16)
    b1p = jnp.pad(b1, (0, pad_c)).reshape(1, -1).astype(jnp.float32)
    b2p = jnp.pad(b2, (0, pad_c)).reshape(1, -1).astype(jnp.float32)
    b3p = b3.reshape(1, -1).astype(jnp.float32)

    use_res = (stride == 1 and cin == cout)
    d = dilation
    Ho = H // 2 if stride == 2 else H

    # bf16 activations: halves input DMA; MXU is bf16-native on v5e/v6e/v7x.
    x = jnp.transpose(x_nchw, (0, 2, 3, 1)).astype(jnp.bfloat16)  # NHWC

    kernel = functools.partial(
        _inverted_residual_kernel,
        H=H, W=W, cin=cin, cmid_p=cmid_p, cout=cout,
        dilation=dilation, stride=stride, use_res=use_res)

    out = pl.pallas_call(
        kernel,
        out_shape=jax.ShapeDtypeStruct((N, Ho, W, cout), jnp.float32),
        grid_spec=pltpu.PrefetchScalarGridSpec(
            num_scalar_prefetch=0,
            grid=(N,),
            in_specs=[
                pl.BlockSpec((1, H, W, cin), lambda b: (b, 0, 0, 0)),
                pl.BlockSpec((cin, cmid_p), lambda b: (0, 0)),
                pl.BlockSpec((1, cmid_p), lambda b: (0, 0)),
                pl.BlockSpec((9, cmid_p), lambda b: (0, 0)),
                pl.BlockSpec((1, cmid_p), lambda b: (0, 0)),
                pl.BlockSpec((cmid_p, cout), lambda b: (0, 0)),
                pl.BlockSpec((1, cout), lambda b: (0, 0)),
            ],
            out_specs=pl.BlockSpec((1, Ho, W, cout), lambda b: (b, 0, 0, 0)),
            scratch_shapes=[pltpu.VMEM((H + 2 * d, W + 2 * d, cmid_p),
                                       jnp.float32)],
        ),
        compiler_params=pltpu.CompilerParams(
            dimension_semantics=("parallel",)),
    )(x, w1p, b1p, wdwp, b2p, w3p, b3p)

    if stride == 2:
        # Rows were subsampled in-kernel; the project conv is pointwise, so
        # subsampling the remaining (column) axis afterwards is exact.  XLA
        # fuses this slice with the NCHW transpose inside the jit.
        out = out[:, :, ::2, :]
    return jnp.transpose(out, (0, 3, 1, 2))                      # back to NCHW


# ---------------- parameter init (deterministic, synthetic) ----------------
def _bn_fold(key, c, eps=1e-5):
    kg, kb, km, kv = jax.random.split(key, 4)
    gamma = 1.0 + 0.1 * jax.random.normal(kg, (c,), jnp.float32)
    beta = 0.1 * jax.random.normal(kb, (c,), jnp.float32)
    mean = 0.1 * jax.random.normal(km, (c,), jnp.float32)
    var = jax.nn.softplus(jax.random.normal(kv, (c,), jnp.float32)) + 0.5
    scale = gamma / jnp.sqrt(var + eps)
    bias = beta - mean * scale
    return scale, bias


def init_inverted_residual(key, inp, oup, expand_ratio):
    cmid = inp * expand_ratio
    ks = jax.random.split(key, 6)
    params = {
        # PyTorch conv weight shapes (OIHW)
        "w1_t": 0.1 * jax.random.normal(ks[0], (cmid, inp, 1, 1), jnp.float32),
        "wdw_t": 0.1 * jax.random.normal(ks[1], (cmid, 1, 3, 3), jnp.float32),
        "w3_t": 0.1 * jax.random.normal(ks[2], (oup, cmid, 1, 1), jnp.float32),
    }
    params["s1"], params["b1"] = _bn_fold(ks[3], cmid)
    params["s2"], params["b2"] = _bn_fold(ks[4], cmid)
    params["s3"], params["b3"] = _bn_fold(ks[5], oup)
    return params


# ---------------- plain-JAX reference (mirrors the PyTorch forward) --------
def reference(x, params, *, stride, dilation=1):
    dn = ("NCHW", "OIHW", "NCHW")
    cin, cout = x.shape[1], params["w3_t"].shape[0]
    bc = lambda v: v[None, :, None, None]
    h = jax.lax.conv_general_dilated(x, params["w1_t"], (1, 1), "VALID",
                                     dimension_numbers=dn)
    h = jnp.maximum(h * bc(params["s1"]) + bc(params["b1"]), 0.0)
    h = jax.lax.conv_general_dilated(
        h, params["wdw_t"], (stride, stride),
        padding=[(dilation, dilation), (dilation, dilation)],
        rhs_dilation=(dilation, dilation), dimension_numbers=dn,
        feature_group_count=params["wdw_t"].shape[0])
    h = jnp.maximum(h * bc(params["s2"]) + bc(params["b2"]), 0.0)
    h = jax.lax.conv_general_dilated(h, params["w3_t"], (1, 1), "VALID",
                                     dimension_numbers=dn)
    h = h * bc(params["s3"]) + bc(params["b3"])
    if stride == 1 and cin == cout:
        h = h + x
    return h


if __name__ == "__main__":
    key = jax.random.PRNGKey(0)
    kx, kp1, kp2 = jax.random.split(key, 3)

    # config 1: inp=oup=4, stride=1, expand=4  -> residual path
    x = jax.random.normal(kx, (2, 4, 16, 16), jnp.float32)
    p1 = init_inverted_residual(kp1, inp=4, oup=4, expand_ratio=4)
    y1 = jax.block_until_ready(inverted_residual(x, p1, stride=1, dilation=1))
    r1 = reference(x, p1, stride=1, dilation=1)
    assert y1.shape == r1.shape
    assert bool(jnp.allclose(y1, r1, rtol=1e-2, atol=1e-2))

    # config 2: inp=4, oup=8, stride=2, expand=6, dilation=2 -> no residual
    p2 = init_inverted_residual(kp2, inp=4, oup=8, expand_ratio=6)
    y2 = jax.block_until_ready(inverted_residual(x, p2, stride=2, dilation=2))
    r2 = reference(x, p2, stride=2, dilation=2)
    assert y2.shape == r2.shape
    assert bool(jnp.allclose(y2, r2, rtol=1e-2, atol=1e-2))

    print("KERNEL_OK")
</pallas_src>

<mosaic_0001>
module attributes {stable_mosaic.version = 11 : i64} {
  func.func @_inverted_residual_kernel(%arg0: i32, %arg1: memref<1x16x16x4xbf16, #tpu.memory_space<vmem>>, %arg2: memref<4x128xbf16, #tpu.memory_space<vmem>>, %arg3: memref<1x128xf32, #tpu.memory_space<vmem>>, %arg4: memref<9x128xf32, #tpu.memory_space<vmem>>, %arg5: memref<1x128xf32, #tpu.memory_space<vmem>>, %arg6: memref<128x4xbf16, #tpu.memory_space<vmem>>, %arg7: memref<1x4xf32, #tpu.memory_space<vmem>>, %arg8: memref<1x16x16x4xf32, #tpu.memory_space<vmem>>, %arg9: memref<18x18x128xf32, #tpu.memory_space<vmem>>) attributes {dimension_semantics = [#tpu.dimension_semantics<parallel>], iteration_bounds = array<i64: 2>, scalar_prefetch = 0 : i64, scratch_operands = 1 : i64, tpu.core_type = #tpu.core_type<tc>, window_params = [{transform_indices = @transform_0, window_bounds = array<i64: 1, 16, 16, 4>}, {pipeline_mode = #tpu.pipeline_mode<synchronous>, transform_indices = @transform_1, window_bounds = array<i64: 4, 128>}, {pipeline_mode = #tpu.pipeline_mode<synchronous>, transform_indices = @transform_2, window_bounds = array<i64: 1, 128>}, {pipeline_mode = #tpu.pipeline_mode<synchronous>, transform_indices = @transform_3, window_bounds = array<i64: 9, 128>}, {pipeline_mode = #tpu.pipeline_mode<synchronous>, transform_indices = @transform_4, window_bounds = array<i64: 1, 128>}, {pipeline_mode = #tpu.pipeline_mode<synchronous>, transform_indices = @transform_5, window_bounds = array<i64: 128, 4>}, {pipeline_mode = #tpu.pipeline_mode<synchronous>, transform_indices = @transform_6, window_bounds = array<i64: 1, 4>}, {transform_indices = @transform_7, window_bounds = array<i64: 1, 16, 16, 4>}]} {
    %c0 = arith.constant 0 : index
    %c0_0 = arith.constant 0 : index
    %c0_1 = arith.constant 0 : index
    %c0_2 = arith.constant 0 : index
    %0 = vector.load %arg1[%c0, %c0_0, %c0_1, %c0_2] : memref<1x16x16x4xbf16, #tpu.memory_space<vmem>>, vector<1x16x16x4xbf16>
    %1 = vector.shape_cast %0 : vector<1x16x16x4xbf16> to vector<16x16x4xbf16>
    %2 = vector.shape_cast %1 : vector<16x16x4xbf16> to vector<256x4xbf16>
    %c0_3 = arith.constant 0 : index
    %c0_4 = arith.constant 0 : index
    %3 = vector.load %arg2[%c0_3, %c0_4] : memref<4x128xbf16, #tpu.memory_space<vmem>>, vector<4x128xbf16>
    %cst = arith.constant dense<0.000000e+00> : vector<256x128xf32>
    %4 = tpu.matmul %2, %3, %cst {dimension_numbers = #tpu.dot_dimension_numbers<[1], [0], [0], [1], [0, 0, 1, 1], [], []>} : vector<256x4xbf16>, vector<4x128xbf16>, vector<256x128xf32> -> vector<256x128xf32>
    %c0_5 = arith.constant 0 : index
    %c0_6 = arith.constant 0 : index
    %5 = vector.load %arg3[%c0_5, %c0_6] : memref<1x128xf32, #tpu.memory_space<vmem>>, vector<1x128xf32>
    %6 = vector.shape_cast %5 : vector<1x128xf32> to vector<128xf32>
    %7 = vector.shape_cast %6 : vector<128xf32> to vector<1x128xf32>
    %8 = vector.broadcast %7 : vector<1x128xf32> to vector<256x128xf32>
    %9 = arith.addf %4, %8 : vector<256x128xf32>
    %cst_7 = arith.constant 0.000000e+00 : f32
    %10 = vector.broadcast %cst_7 : f32 to vector<256x128xf32>
    %11 = arith.maximumf %9, %10 : vector<256x128xf32>
    %cst_8 = arith.constant 0.000000e+00 : f32
    %12 = vector.broadcast %cst_8 : f32 to vector<1x18x128xf32>
    %c0_9 = arith.constant 0 : index
    %c0_10 = arith.constant 0 : index
    %c0_11 = arith.constant 0 : index
    %13 = vector.load %arg9[%c0_9, %c0_10, %c0_11] : memref<18x18x128xf32, #tpu.memory_space<vmem>>, vector<1x18x128xf32>
    tpu.vector_store %arg9[%c0_9, %c0_10, %c0_11], %12 {strides = array<i32>} : memref<18x18x128xf32, #tpu.memory_space<vmem>>, vector<1x18x128xf32>,
    %cst_12 = arith.constant 0.000000e+00 : f32
    %14 = vector.broadcast %cst_12 : f32 to vector<1x18x128xf32>
    %c17 = arith.constant 17 : index
    %c0_13 = arith.constant 0 : index
    %c0_14 = arith.constant 0 : index
    %15 = vector.load %arg9[%c17, %c0_13, %c0_14] : memref<18x18x128xf32, #tpu.memory_space<vmem>>, vector<1x18x128xf32>
    tpu.vector_store %arg9[%c17, %c0_13, %c0_14], %14 {strides = array<i32>} : memref<18x18x128xf32, #tpu.memory_space<vmem>>, vector<1x18x128xf32>,
    %cst_15 = arith.constant 0.000000e+00 : f32
    %16 = vector.broadcast %cst_15 : f32 to vector<16x1x128xf32>
    %c1 = arith.constant 1 : index
    %c0_16 = arith.constant 0 : index
    %c0_17 = arith.constant 0 : index
    %17 = vector.load %arg9[%c1, %c0_16, %c0_17] : memref<18x18x128xf32, #tpu.memory_space<vmem>>, vector<16x1x128xf32>
    tpu.vector_store %arg9[%c1, %c0_16, %c0_17], %16 {strides = array<i32>} : memref<18x18x128xf32, #tpu.memory_space<vmem>>, vector<16x1x128xf32>,
    %cst_18 = arith.constant 0.000000e+00 : f32
    %18 = vector.broadcast %cst_18 : f32 to vector<16x1x128xf32>
    %c1_19 = arith.constant 1 : index
    %c17_20 = arith.constant 17 : index
    %c0_21 = arith.constant 0 : index
    %19 = vector.load %arg9[%c1_19, %c17_20, %c0_21] : memref<18x18x128xf32, #tpu.memory_space<vmem>>, vector<16x1x128xf32>
    tpu.vector_store %arg9[%c1_19, %c17_20, %c0_21], %18 {strides = array<i32>} : memref<18x18x128xf32, #tpu.memory_space<vmem>>, vector<16x1x128xf32>,
    %20 = vector.shape_cast %11 : vector<256x128xf32> to vector<16x16x128xf32>
    %c1_22 = arith.constant 1 : index
    %c1_23 = arith.constant 1 : index
    %c0_24 = arith.constant 0 : index
    %21 = vector.load %arg9[%c1_22, %c1_23, %c0_24] : memref<18x18x128xf32, #tpu.memory_space<vmem>>, vector<16x16x128xf32>
    tpu.vector_store %arg9[%c1_22, %c1_23, %c0_24], %20 {strides = array<i32>} : memref<18x18x128xf32, #tpu.memory_space<vmem>>, vector<16x16x128xf32>,
    %c0_25 = arith.constant 0 : index
    %c0_26 = arith.constant 0 : index
    %22 = vector.load %arg4[%c0_25, %c0_26] : memref<9x128xf32, #tpu.memory_space<vmem>>, vector<9x128xf32>
    %c0_27 = arith.constant 0 : index
    %c0_28 = arith.constant 0 : index
    %c0_29 = arith.constant 0 : index
    %23 = vector.load %arg9[%c0_27, %c0_28, %c0_29] : memref<18x18x128xf32, #tpu.memory_space<vmem>>, vector<16x16x128xf32>
    %24 = vector.extract_strided_slice %22 {offsets = [0, 0], sizes = [1, 128], strides = [1, 1]} : vector<9x128xf32> to vector<1x128xf32>
    %25 = vector.shape_cast %24 : vector<1x128xf32> to vector<128xf32>
    %26 = vector.shape_cast %25 : vector<128xf32> to vector<1x1x128xf32>
    %27 = vector.broadcast %26 : vector<1x1x128xf32> to vector<16x16x128xf32>
    %28 = arith.mulf %23, %27 : vector<16x16x128xf32>
    %c0_30 = arith.constant 0 : index
    %c1_31 = arith.constant 1 : index
    %c0_32 = arith.constant 0 : index
    %29 = vector.load %arg9[%c0_30, %c1_31, %c0_32] : memref<18x18x128xf32, #tpu.memory_space<vmem>>, vector<16x16x128xf32>
    %30 = vector.extract_strided_slice %22 {offsets = [1, 0], sizes = [1, 128], strides = [1, 1]} : vector<9x128xf32> to vector<1x128xf32>
    %31 = vector.shape_cast %30 : vector<1x128xf32> to vector<128xf32>
    %32 = vector.shape_cast %31 : vector<128xf32> to vector<1x1x128xf32>
    %33 = vector.broadcast %32 : vector<1x1x128xf32> to vector<16x16x128xf32>
    %34 = arith.mulf %29, %33 : vector<16x16x128xf32>
    %35 = arith.addf %28, %34 : vector<16x16x128xf32>
    %c0_33 = arith.constant 0 : index
    %c2 = arith.constant 2 : index
    %c0_34 = arith.constant 0 : index
    %36 = vector.load %arg9[%c0_33, %c2, %c0_34] : memref<18x18x128xf32, #tpu.memory_space<vmem>>, vector<16x16x128xf32>
    %37 = vector.extract_strided_slice %22 {offsets = [2, 0], sizes = [1, 128], strides = [1, 1]} : vector<9x128xf32> to vector<1x128xf32>
    %38 = vector.shape_cast %37 : vector<1x128xf32> to vector<128xf32>
    %39 = vector.shape_cast %38 : vector<128xf32> to vector<1x1x128xf32>
    %40 = vector.broadcast %39 : vector<1x1x128xf32> to vector<16x16x128xf32>
    %41 = arith.mulf %36, %40 : vector<16x16x128xf32>
    %42 = arith.addf %35, %41 : vector<16x16x128xf32>
    %c1_35 = arith.constant 1 : index
    %c0_36 = arith.constant 0 : index
    %c0_37 = arith.constant 0 : index
    %43 = vector.load %arg9[%c1_35, %c0_36, %c0_37] : memref<18x18x128xf32, #tpu.memory_space<vmem>>, vector<16x16x128xf32>
    %44 = vector.extract_strided_slice %22 {offsets = [3, 0], sizes = [1, 128], strides = [1, 1]} : vector<9x128xf32> to vector<1x128xf32>
    %45 = vector.shape_cast %44 : vector<1x128xf32> to vector<128xf32>
    %46 = vector.shape_cast %45 : vector<128xf32> to vector<1x1x128xf32>
    %47 = vector.broadcast %46 : vector<1x1x128xf32> to vector<16x16x128xf32>
    %48 = arith.mulf %43, %47 : vector<16x16x128xf32>
    %49 = arith.addf %42, %48 : vector<16x16x128xf32>
    %c1_38 = arith.constant 1 : index
    %c1_39 = arith.constant 1 : index
    %c0_40 = arith.constant 0 : index
    %50 = vector.load %arg9[%c1_38, %c1_39, %c0_40] : memref<18x18x128xf32, #tpu.memory_space<vmem>>, vector<16x16x128xf32>
    %51 = vector.extract_strided_slice %22 {offsets = [4, 0], sizes = [1, 128], strides = [1, 1]} : vector<9x128xf32> to vector<1x128xf32>
    %52 = vector.shape_cast %51 : vector<1x128xf32> to vector<128xf32>
    %53 = vector.shape_cast %52 : vector<128xf32> to vector<1x1x128xf32>
    %54 = vector.broadcast %53 : vector<1x1x128xf32> to vector<16x16x128xf32>
    %55 = arith.mulf %50, %54 : vector<16x16x128xf32>
    %56 = arith.addf %49, %55 : vector<16x16x128xf32>
    %c1_41 = arith.constant 1 : index
    %c2_42 = arith.constant 2 : index
    %c0_43 = arith.constant 0 : index
    %57 = vector.load %arg9[%c1_41, %c2_42, %c0_43] : memref<18x18x128xf32, #tpu.memory_space<vmem>>, vector<16x16x128xf32>
    %58 = vector.extract_strided_slice %22 {offsets = [5, 0], sizes = [1, 128], strides = [1, 1]} : vector<9x128xf32> to vector<1x128xf32>
    %59 = vector.shape_cast %58 : vector<1x128xf32> to vector<128xf32>
    %60 = vector.shape_cast %59 : vector<128xf32> to vector<1x1x128xf32>
    %61 = vector.broadcast %60 : vector<1x1x128xf32> to vector<16x16x128xf32>
    %62 = arith.mulf %57, %61 : vector<16x16x128xf32>
    %63 = arith.addf %56, %62 : vector<16x16x128xf32>
    %c2_44 = arith.constant 2 : index
    %c0_45 = arith.constant 0 : index
    %c0_46 = arith.constant 0 : index
    %64 = vector.load %arg9[%c2_44, %c0_45, %c0_46] : memref<18x18x128xf32, #tpu.memory_space<vmem>>, vector<16x16x128xf32>
    %65 = vector.extract_strided_slice %22 {offsets = [6, 0], sizes = [1, 128], strides = [1, 1]} : vector<9x128xf32> to vector<1x128xf32>
    %66 = vector.shape_cast %65 : vector<1x128xf32> to vector<128xf32>
    %67 = vector.shape_cast %66 : vector<128xf32> to vector<1x1x128xf32>
    %68 = vector.broadcast %67 : vector<1x1x128xf32> to vector<16x16x128xf32>
    %69 = arith.mulf %64, %68 : vector<16x16x128xf32>
    %70 = arith.addf %63, %69 : vector<16x16x128xf32>
    %c2_47 = arith.constant 2 : index
    %c1_48 = arith.constant 1 : index
    %c0_49 = arith.constant 0 : index
    %71 = vector.load %arg9[%c2_47, %c1_48, %c0_49] : memref<18x18x128xf32, #tpu.memory_space<vmem>>, vector<16x16x128xf32>
    %72 = vector.extract_strided_slice %22 {offsets = [7, 0], sizes = [1, 128], strides = [1, 1]} : vector<9x128xf32> to vector<1x128xf32>
    %73 = vector.shape_cast %72 : vector<1x128xf32> to vector<128xf32>
    %74 = vector.shape_cast %73 : vector<128xf32> to vector<1x1x128xf32>
    %75 = vector.broadcast %74 : vector<1x1x128xf32> to vector<16x16x128xf32>
    %76 = arith.mulf %71, %75 : vector<16x16x128xf32>
    %77 = arith.addf %70, %76 : vector<16x16x128xf32>
    %c2_50 = arith.constant 2 : index
    %c2_51 = arith.constant 2 : index
    %c0_52 = arith.constant 0 : index
    %78 = vector.load %arg9[%c2_50, %c2_51, %c0_52] : memref<18x18x128xf32, #tpu.memory_space<vmem>>, vector<16x16x128xf32>
    %79 = vector.extract_strided_slice %22 {offsets = [8, 0], sizes = [1, 128], strides = [1, 1]} : vector<9x128xf32> to vector<1x128xf32>
    %80 = vector.shape_cast %79 : vector<1x128xf32> to vector<128xf32>
    %81 = vector.shape_cast %80 : vector<128xf32> to vector<1x1x128xf32>
    %82 = vector.broadcast %81 : vector<1x1x128xf32> to vector<16x16x128xf32>
    %83 = arith.mulf %78, %82 : vector<16x16x128xf32>
    %84 = arith.addf %77, %83 : vector<16x16x128xf32>
    %c0_53 = arith.constant 0 : index
    %c0_54 = arith.constant 0 : index
    %85 = vector.load %arg5[%c0_53, %c0_54] : memref<1x128xf32, #tpu.memory_space<vmem>>, vector<1x128xf32>
    %86 = vector.shape_cast %85 : vector<1x128xf32> to vector<128xf32>
    %87 = vector.shape_cast %86 : vector<128xf32> to vector<1x1x128xf32>
    %88 = vector.broadcast %87 : vector<1x1x128xf32> to vector<16x16x128xf32>
    %89 = arith.addf %84, %88 : vector<16x16x128xf32>
    %cst_55 = arith.constant 0.000000e+00 : f32
    %90 = vector.broadcast %cst_55 : f32 to vector<16x16x128xf32>
    %91 = arith.maximumf %89, %90 : vector<16x16x128xf32>
    %92 = vector.shape_cast %91 : vector<16x16x128xf32> to vector<256x128xf32>
    %93 = arith.truncf %92 : vector<256x128xf32> to vector<256x128xbf16>
    %c0_56 = arith.constant 0 : index
    %c0_57 = arith.constant 0 : index
    %94 = vector.load %arg6[%c0_56, %c0_57] : memref<128x4xbf16, #tpu.memory_space<vmem>>, vector<128x4xbf16>
    %cst_58 = arith.constant dense<0.000000e+00> : vector<256x4xf32>
    %95 = tpu.matmul %93, %94, %cst_58 {dimension_numbers = #tpu.dot_dimension_numbers<[1], [0], [0], [1], [0, 0, 1, 1], [], []>} : vector<256x128xbf16>, vector<128x4xbf16>, vector<256x4xf32> -> vector<256x4xf32>
    %c0_59 = arith.constant 0 : index
    %c0_60 = arith.constant 0 : index
    %96 = vector.load %arg7[%c0_59, %c0_60] : memref<1x4xf32, #tpu.memory_space<vmem>>, vector<1x4xf32>
    %97 = vector.shape_cast %96 : vector<1x4xf32> to vector<4xf32>
    %98 = vector.shape_cast %97 : vector<4xf32> to vector<1x4xf32>
    %99 = vector.broadcast %98 : vector<1x4xf32> to vector<256x4xf32>
    %100 = arith.addf %95, %99 : vector<256x4xf32>
    %101 = arith.extf %2 : vector<256x4xbf16> to vector<256x4xf32>
    %102 = arith.addf %100, %101 : vector<256x4xf32>
    %103 = vector.shape_cast %102 : vector<256x4xf32> to vector<16x16x4xf32>
    %c0_61 = arith.constant 0 : index
    %c0_62 = arith.constant 0 : index
    %c0_63 = arith.constant 0 : index
    %c0_64 = arith.constant 0 : index
    %104 = vector.load %arg8[%c0_61, %c0_62, %c0_63, %c0_64] : memref<1x16x16x4xf32, #tpu.memory_space<vmem>>, vector<1x16x16x4xf32>
    %105 = vector.shape_cast %104 : vector<1x16x16x4xf32> to vector<16x16x4xf32>
    %106 = vector.shape_cast %103 : vector<16x16x4xf32> to vector<1x16x16x4xf32>
    tpu.vector_store %arg8[%c0_61, %c0_62, %c0_63, %c0_64], %106 {strides = array<i32>} : memref<1x16x16x4xf32, #tpu.memory_space<vmem>>, vector<1x16x16x4xf32>,
    return
  }
  func.func @transform_0(%arg0: i32) -> (i32, i32, i32, i32) {
    %c0_i32 = arith.constant 0 : i32
    %c0_i32_0 = arith.constant 0 : i32
    %c0_i32_1 = arith.constant 0 : i32
    %c0_i32_2 = arith.constant 0 : i32
    return %arg0, %c0_i32, %c0_i32_0, %c0_i32_1 : i32, i32, i32, i32
  }
  func.func @transform_1(%arg0: i32) -> (i32, i32) {
    %c0_i32 = arith.constant 0 : i32
    %c0_i32_0 = arith.constant 0 : i32
    %c0_i32_1 = arith.constant 0 : i32
    return %c0_i32, %c0_i32_0 : i32, i32
  }
  func.func @transform_2(%arg0: i32) -> (i32, i32) {
    %c0_i32 = arith.constant 0 : i32
    %c0_i32_0 = arith.constant 0 : i32
    %c0_i32_1 = arith.constant 0 : i32
    return %c0_i32, %c0_i32_0 : i32, i32
  }
  func.func @transform_3(%arg0: i32) -> (i32, i32) {
    %c0_i32 = arith.constant 0 : i32
    %c0_i32_0 = arith.constant 0 : i32
    %c0_i32_1 = arith.constant 0 : i32
    return %c0_i32, %c0_i32_0 : i32, i32
  }
  func.func @transform_4(%arg0: i32) -> (i32, i32) {
    %c0_i32 = arith.constant 0 : i32
    %c0_i32_0 = arith.constant 0 : i32
    %c0_i32_1 = arith.constant 0 : i32
    return %c0_i32, %c0_i32_0 : i32, i32
  }
  func.func @transform_5(%arg0: i32) -> (i32, i32) {
    %c0_i32 = arith.constant 0 : i32
    %c0_i32_0 = arith.constant 0 : i32
    %c0_i32_1 = arith.constant 0 : i32
    return %c0_i32, %c0_i32_0 : i32, i32
  }
  func.func @transform_6(%arg0: i32) -> (i32, i32) {
    %c0_i32 = arith.constant 0 : i32
    %c0_i32_0 = arith.constant 0 : i32
    %c0_i32_1 = arith.constant 0 : i32
    return %c0_i32, %c0_i32_0 : i32, i32
  }
  func.func @transform_7(%arg0: i32) -> (i32, i32, i32, i32) {
    %c0_i32 = arith.constant 0 : i32
    %c0_i32_0 = arith.constant 0 : i32
    %c0_i32_1 = arith.constant 0 : i32
    %c0_i32_2 = arith.constant 0 : i32
    return %arg0, %c0_i32, %c0_i32_0, %c0_i32_1 : i32, i32, i32, i32
  }
}

</mosaic_0001>

<llo_original>
// kernel: squeeze.4
$region0: #{squeeze.4}
  %s0 = inlined_call_operand.vmem [shape: f32[16,3,3], index: 0, kind: input, shape index: {}]
  %s1 = inlined_call_operand.vmem [shape: f32[16,9], index: 1, kind: output, shape index: {}]
  $region1: #{squeeze.4} parent=0
    #allocation0 [shape = 'u8[12288]{0}', space=vmem, size = 0x3000, scoped, tag = 'scoped mem for input reshape']
    %s3 = sshllo.u32 0, 4
    %s4 = smul.addr 4, 2
    %s5 = scalar_lea.vmem %s0, %s4
    %v6 = vld [vmem:[%s5] sm:%s3]
    %s7 = scalar_lea.vmem [#allocation0], 16
    %8 = vst [vmem:[%s7] sm:%s3] %v6
    %s9 = scalar_lea.vmem %s0, 4
    %v10 = vld [vmem:[%s9] sm:%s3]
    %s11 = scalar_lea.vmem [#allocation0], 8
    %12 = vst [vmem:[%s11] sm:%s3] %v10
    %v13 = vld [vmem:[%s0] sm:%s3]
    %14 = vst [vmem:[#allocation0] sm:%s3] %v13
    %v15 = vld [vmem:[#allocation0] sm:$0x7]
    %vm16 = vcmask 130048
    %17 = vst.msk [vmem:[%s1] sm:$0x7] %vm16, %v15
    %s18 = scalar_lea.vmem [#allocation0], 8
    %v19 = vld [vmem:[%s18] sm:$0x7]
    %vm20 = vcmask 130048
    %s21 = scalar_lea.vmem %s1, 3
    %22 = vst.msk [vmem:[%s21] sm:$0x7] %vm20, %v19
    %s23 = scalar_lea.vmem [#allocation0], 16
    %v24 = vld [vmem:[%s23] sm:$0x7]
    %vm25 = vcmask 130048
    %s26 = scalar_lea.vmem %s1, 6
    %27 = vst.msk [vmem:[%s26] sm:$0x7] %vm25, %v24

// kernel: inverted_residual.1
$region0: #{inverted_residual.1}
  #allocation0 [shape = 'u32[]', space=smem, size = 0x4, offset = 0x4, fixed_abs, tag = 'smem constant byte address 0x4 - core index']
  #allocation1 [shape = 'u32[144,128]{1,0:T(1,128)}', space=vmem, size = 0x12000, scoped, tag = 'internal scratch']
  #allocation2 [shape = 'f32[18,18,128]{2,1,0:T(8,128)}', space=vmem, size = 0x36000, scoped, tag = 'scratch operand']
  %s0 = inlined_call_operand.vmem [shape: bf16[2,16,16,4], index: 0, kind: input, shape index: {}]
  %s1 = inlined_call_operand.vmem [shape: bf16[4,128], index: 1, kind: input, shape index: {}]
  %s2 = inlined_call_operand.vmem [shape: f32[1,128], index: 2, kind: input, shape index: {}]
  %s3 = inlined_call_operand.vmem [shape: f32[9,128], index: 3, kind: input, shape index: {}]
  %s4 = inlined_call_operand.vmem [shape: f32[1,128], index: 4, kind: input, shape index: {}]
  %s5 = inlined_call_operand.vmem [shape: bf16[128,4], index: 5, kind: input, shape index: {}]
  %s6 = inlined_call_operand.vmem [shape: f32[1,4], index: 6, kind: input, shape index: {}]
  %s7 = inlined_call_operand.vmem [shape: f32[2,16,16,4], index: 7, kind: output, shape index: {}]
  %s8 = sld [smem:[#allocation0]]
  $region61: #{inverted_residual.1} parent=0
    _
  %s10 = ssub.s32 1, %s8
  %s11 = scalar_select 0, %s10, %s8
  loop: start=0, step=1, limit=4
  $region2: #{inverted_residual.1} parent=0 // loop_pre_header
    _
  $region3: #{inverted_residual.1} parent=0 // loop_header
    %s13 = sphi 0, %s17
    %p14 = scmp.ge.s32.totalorder %s13, 4
    %s23 = sphi 0, %s25
    %s26 = sphi 0, %s23
    %s27 = sphi 0, %s26
    %s43 = sphi 0, %s27
    %s47 = sphi 0, %s47
    %s49 = sphi 0, %s47
    %s50 = sphi 0, %s49
    %s64 = sphi 0, %s50
    %s68 = sphi 0, %s68
    %s70 = sphi 0, %s68
    %s71 = sphi 0, %s70
    %s85 = sphi 0, %s71
    %s89 = sphi 0, %s89
    %s91 = sphi 0, %s89
    %s92 = sphi 0, %s91
    %s106 = sphi 0, %s92
    %s110 = sphi 0, %s110
    %s112 = sphi 0, %s110
    %s113 = sphi 0, %s112
    %s127 = sphi 0, %s113
    %s131 = sphi 0, %s131
    %s133 = sphi 0, %s131
    %s134 = sphi 0, %s133
    %s148 = sphi 0, %s134
    %s152 = sphi 0, %s152
    %s154 = sphi 0, %s152
    %s155 = sphi 0, %s154
    %s169 = sphi 0, %s155
    %s175 = sphi 0, %s177
    %s178 = sphi 0, %s175
    %s179 = sphi 0, %s178
    %s195 = sphi 0, %s179
  $region4: #{inverted_residual.1} parent=0 // loop_header_branch
    %16 = sbr.rel (%p14) target = $region8
  $region5: #{inverted_residual.1} parent=0 // loop_body
    %s18 = ssub.s32 %s13, 1
    %s19 = ssub.s32 %s13, 2
    %s20 = sadd.s32 %s13, 1
    %s21 = ssub.s32 %s13, %s20
    %p22 = scmp.eq.s32.totalorder %s21, 0
    %s24 = sadd.s32 %s23, 1
    %s25 = scalar_select %p22, %s23, %s24
    %p28 = pneg %p22
    %p29 = scmp.eq.s32.totalorder %s13, 1
    %p30 = por %p28, %p29
    %p31 = scmp.ne.s32.totalorder %s23, %s26
    %p32 = scmp.eq.s32.totalorder %s13, 0
    %p33 = por %p31, %p32
    %p34 = scmp.ne.s32.totalorder %s23, %s26
    %p35 = scmp.eq.s32.totalorder %s18, 1
    %p36 = por %p34, %p35
    %p37 = scmp.ne.s32.totalorder %s26, %s27
    %p38 = scmp.eq.s32.totalorder %s18, 0
    %p39 = por %p37, %p38
    %p40 = scmp.ne.s32.totalorder %s26, %s27
    %p41 = scmp.eq.s32.totalorder %s19, 1
    %p42 = por %p40, %p41
    %p44 = scmp.ne.s32.totalorder %s27, %s43
    %p45 = scmp.eq.s32.totalorder %s19, 0
    %p46 = por %p44, %p45
    %s48 = sadd.s32 %s47, 1
    %p51 = scmp.eq.s32.totalorder %s13, 1
    %p52 = scmp.ne.s32.totalorder %s47, %s49
    %p53 = scmp.eq.s32.totalorder %s13, 0
    %p54 = por %p52, %p53
    %p55 = scmp.ne.s32.totalorder %s47, %s49
    %p56 = scmp.eq.s32.totalorder %s18, 1
    %p57 = por %p55, %p56
    %p58 = scmp.ne.s32.totalorder %s49, %s50
    %p59 = scmp.eq.s32.totalorder %s18, 0
    %p60 = por %p58, %p59
    %p61 = scmp.ne.s32.totalorder %s49, %s50
    %p62 = scmp.eq.s32.totalorder %s19, 1
    %p63 = por %p61, %p62
    %p65 = scmp.ne.s32.totalorder %s50, %s64
    %p66 = scmp.eq.s32.totalorder %s19, 0
    %p67 = por %p65, %p66
    %s69 = sadd.s32 %s68, 1
    %p72 = scmp.eq.s32.totalorder %s13, 1
    %p73 = scmp.ne.s32.totalorder %s68, %s70
    %p74 = scmp.eq.s32.totalorder %s13, 0
    %p75 = por %p73, %p74
    %p76 = scmp.ne.s32.totalorder %s68, %s70
    %p77 = scmp.eq.s32.totalorder %s18, 1
    %p78 = por %p76, %p77
    %p79 = scmp.ne.s32.totalorder %s70, %s71
    %p80 = scmp.eq.s32.totalorder %s18, 0
    %p81 = por %p79, %p80
    %p82 = scmp.ne.s32.totalorder %s70, %s71
    %p83 = scmp.eq.s32.totalorder %s19, 1
    %p84 = por %p82, %p83
    %p86 = scmp.ne.s32.totalorder %s71, %s85
    %p87 = scmp.eq.s32.totalorder %s19, 0
    %p88 = por %p86, %p87
    %s90 = sadd.s32 %s89, 1
    %p93 = scmp.eq.s32.totalorder %s13, 1
    %p94 = scmp.ne.s32.totalorder %s89, %s91
    %p95 = scmp.eq.s32.totalorder %s13, 0
    %p96 = por %p94, %p95
    %p97 = scmp.ne.s32.totalorder %s89, %s91
    %p98 = scmp.eq.s32.totalorder %s18, 1
    %p99 = por %p97, %p98
    %p100 = scmp.ne.s32.totalorder %s91, %s92
    %p101 = scmp.eq.s32.totalorder %s18, 0
    %p102 = por %p100, %p101
    %p103 = scmp.ne.s32.totalorder %s91, %s92
    %p104 = scmp.eq.s32.totalorder %s19, 1
    %p105 = por %p103, %p104
    %p107 = scmp.ne.s32.totalorder %s92, %s106
    %p108 = scmp.eq.s32.totalorder %s19, 0
    %p109 = por %p107, %p108
    %s111 = sadd.s32 %s110, 1
    %p114 = scmp.eq.s32.totalorder %s13, 1
    %p115 = scmp.ne.s32.totalorder %s110, %s112
    %p116 = scmp.eq.s32.totalorder %s13, 0
    %p117 = por %p115, %p116
    %p118 = scmp.ne.s32.totalorder %s110, %s112
    %p119 = scmp.eq.s32.totalorder %s18, 1
    %p120 = por %p118, %p119
    %p121 = scmp.ne.s32.totalorder %s112, %s113
    %p122 = scmp.eq.s32.totalorder %s18, 0
    %p123 = por %p121, %p122
    %p124 = scmp.ne.s32.totalorder %s112, %s113
    %p125 = scmp.eq.s32.totalorder %s19, 1
    %p126 = por %p124, %p125
    %p128 = scmp.ne.s32.totalorder %s113, %s127
    %p129 = scmp.eq.s32.totalorder %s19, 0
    %p130 = por %p128, %p129
    %s132 = sadd.s32 %s131, 1
    %p135 = scmp.eq.s32.totalorder %s13, 1
    %p136 = scmp.ne.s32.totalorder %s131, %s133
    %p137 = scmp.eq.s32.totalorder %s13, 0
    %p138 = por %p136, %p137
    %p139 = scmp.ne.s32.totalorder %s131, %s133
    %p140 = scmp.eq.s32.totalorder %s18, 1
    %p141 = por %p139, %p140
    %p142 = scmp.ne.s32.totalorder %s133, %s134
    %p143 = scmp.eq.s32.totalorder %s18, 0
    %p144 = por %p142, %p143
    %p145 = scmp.ne.s32.totalorder %s133, %s134
    %p146 = scmp.eq.s32.totalorder %s19, 1
    %p147 = por %p145, %p146
    %p149 = scmp.ne.s32.totalorder %s134, %s148
    %p150 = scmp.eq.s32.totalorder %s19, 0
    %p151 = por %p149, %p150
    %s153 = sadd.s32 %s152, 1
    %p156 = scmp.eq.s32.totalorder %s13, 1
    %p157 = scmp.ne.s32.totalorder %s152, %s154
    %p158 = scmp.eq.s32.totalorder %s13, 0
    %p159 = por %p157, %p158
    %p160 = scmp.ne.s32.totalorder %s152, %s154
    %p161 = scmp.eq.s32.totalorder %s18, 1
    %p162 = por %p160, %p161
    %p163 = scmp.ne.s32.totalorder %s154, %s155
    %p164 = scmp.eq.s32.totalorder %s18, 0
    %p165 = por %p163, %p164
    %p166 = scmp.ne.s32.totalorder %s154, %s155
    %p167 = scmp.eq.s32.totalorder %s19, 1
    %p168 = por %p166, %p167
    %p170 = scmp.ne.s32.totalorder %s155, %s169
    %p171 = scmp.eq.s32.totalorder %s19, 0
    %p172 = por %p170, %p171
    %s173 = ssub.s32 %s13, %s20
    %p174 = scmp.eq.s32.totalorder %s173, 0
    %s176 = sadd.s32 %s175, 1
    %s177 = scalar_select %p174, %s175, %s176
    %p180 = pneg %p174
    %p181 = scmp.eq.s32.totalorder %s13, 1
    %p182 = por %p180, %p181
    %p183 = scmp.ne.s32.totalorder %s175, %s178
    %p184 = scmp.eq.s32.totalorder %s13, 0
    %p185 = por %p183, %p184
    %p186 = scmp.ne.s32.totalorder %s175, %s178
    %p187 = scmp.eq.s32.totalorder %s18, 1
    %p188 = por %p186, %p187
    %p189 = scmp.ne.s32.totalorder %s178, %s179
    %p190 = scmp.eq.s32.totalorder %s18, 0
    %p191 = por %p189, %p190
    %p192 = scmp.ne.s32.totalorder %s178, %s179
    %p193 = scmp.eq.s32.totalorder %s19, 1
    %p194 = por %p192, %p193
    %p196 = scmp.ne.s32.totalorder %s179, %s195
    %p197 = scmp.eq.s32.totalorder %s19, 0
    %p198 = por %p196, %p197
    %p199 = scmp.le.s32.totalorder 1, %s13
    %p200 = scmp.lt.s32.totalorder %s13, 3
    %p201 = pnand %p199, %p200
    %p202 = pneg %p201
    // Predicated region
    $region9: #{inverted_residual.1} parent=5 // pred_check
      _
    $region10: #{inverted_residual.1} parent=5 // pred_check_branch
      %204 = sbr.rel (%p201) target = $region12
    $region11: #{inverted_residual.1} parent=5 // pred_region
      %s205 = ssub.s32 %s13, 1
      // Predicated region
      $region13: #{inverted_residual.1} parent=11 // pred_check
        %p206 = pneg %p60
      $region14: #{inverted_residual.1} parent=11 // pred_check_branch
        %208 = sbr.rel (%p206) target = $region16
      $region15: #{inverted_residual.1} parent=11 // pred_region
        _
      $region16: #{inverted_residual.1} parent=11 // pred_fallthru
        _
      // Predicated region
      $region17: #{inverted_residual.1} parent=11 // pred_check
        %p209 = pneg %p81
      $region18: #{inverted_residual.1} parent=11 // pred_check_branch
        %211 = sbr.rel (%p209) target = $region20
      $region19: #{inverted_residual.1} parent=11 // pred_region
        _
      $region20: #{inverted_residual.1} parent=11 // pred_fallthru
        _
      // Predicated region
      $region21: #{inverted_residual.1} parent=11 // pred_check
        %p212 = pneg %p102
      $region22: #{inverted_residual.1} parent=11 // pred_check_branch
        %214 = sbr.rel (%p212) target = $region24
      $region23: #{inverted_residual.1} parent=11 // pred_region
        _
      $region24: #{inverted_residual.1} parent=11 // pred_fallthru
        _
      // Predicated region
      $region25: #{inverted_residual.1} parent=11 // pred_check
        %p215 = pneg %p123
      $region26: #{inverted_residual.1} parent=11 // pred_check_branch
        %217 = sbr.rel (%p215) target = $region28
      $region27: #{inverted_residual.1} parent=11 // pred_region
        _
      $region28: #{inverted_residual.1} parent=11 // pred_fallthru
        _
      // Predicated region
      $region29: #{inverted_residual.1} parent=11 // pred_check
        %p218 = pneg %p144
      $region30: #{inverted_residual.1} parent=11 // pred_check_branch
        %220 = sbr.rel (%p218) target = $region32
      $region31: #{inverted_residual.1} parent=11 // pred_region
        _
      $region32: #{inverted_residual.1} parent=11 // pred_fallthru
        _
      // Predicated region
      $region33: #{inverted_residual.1} parent=11 // pred_check
        %p221 = pneg %p165
      $region34: #{inverted_residual.1} parent=11 // pred_check_branch
        %223 = sbr.rel (%p221) target = $region36
      $region35: #{inverted_residual.1} parent=11 // pred_region
        _
      $region36: #{inverted_residual.1} parent=11 // pred_fallthru
        _
    $region12: #{inverted_residual.1} parent=5 // pred_fallthru
      _
    %p224 = scmp.lt.s32.totalorder %s13, 2
    // Predicated region
    $region37: #{inverted_residual.1} parent=5 // pred_check
      %p225 = pneg %p224
    $region38: #{inverted_residual.1} parent=5 // pred_check_branch
      %227 = sbr.rel (%p225) target = $region40
    $region39: #{inverted_residual.1} parent=5 // pred_region
      // Predicated region
      $region41: #{inverted_residual.1} parent=39 // pred_check
        %p228 = pneg %p33
      $region42: #{inverted_residual.1} parent=39 // pred_check_branch
        %230 = sbr.rel (%p228) target = $region44
      $region43: #{inverted_residual.1} parent=39 // pred_region
        %p231 = scmp.lt.s32.totalorder %s13, 1
        %s232 = scalar_select %p231, %s13, 1
        %s233 = smul.addr %s232, 32
        %s234 = smul.addr %s233, 4
        %s235 = scalar_lea.vmem %s0, %s234
      $region44: #{inverted_residual.1} parent=39 // pred_fallthru
        _
    $region40: #{inverted_residual.1} parent=5 // pred_fallthru
      _
    %p236 = scmp.le.s32.totalorder 1, %s13
    %p237 = scmp.lt.s32.totalorder %s13, 3
    %p238 = pnand %p236, %p237
    %p239 = pneg %p238
    // Predicated region
    $region45: #{inverted_residual.1} parent=5 // pred_check
      _
    $region46: #{inverted_residual.1} parent=5 // pred_check_branch
      %241 = sbr.rel (%p238) target = $region48
    $region47: #{inverted_residual.1} parent=5 // pred_region
      %s242 = ssub.s32 %s13, 1
      %p243 = scmp.lt.s32.totalorder %s18, 1
      %s244 = scalar_select %p243, %s18, 1
      %s245 = smul.addr %s244, 32
      %s246 = smul.addr %s245, 4
      %s247 = scalar_lea.vmem %s0, %s246
      %p248 = pneg %p39
      %p249 = pneg %p36
      %p250 = pneg %p60
      %p251 = pneg %p57
      %p252 = pneg %p81
      %p253 = pneg %p78
      %p254 = pneg %p102
      %p255 = pneg %p99
      %p256 = pneg %p123
      %p257 = pneg %p120
      %p258 = pneg %p144
      %p259 = pneg %p141
      %p260 = pneg %p165
      %p261 = pneg %p162
      %p262 = pneg %p191
      %p263 = pneg %p188
      %p264 = scmp.lt.s32.totalorder %s18, 1
      %s265 = scalar_select %p264, %s18, 1
      %s266 = smul.addr %s265, 32
      %s267 = smul.addr %s266, 8
      %s268 = scalar_lea.vmem %s7, %s267
      %p269 = scmp.lt.s32.totalorder %s18, 1
      %s270 = scalar_select %p269, %s18, 1
      %s271 = smul.addr %s270, 32
      %s272 = smul.addr %s271, 4
      %s273 = scalar_lea.vmem %s0, %s272
      %p274 = scmp.lt.s32.totalorder %s18, 1
      %s275 = scalar_select %p274, %s18, 1
      %s276 = smul.addr %s275, 32
      %s277 = smul.addr %s276, 8
      %s278 = scalar_lea.vmem %s7, %s277
      %v280 = vld [vmem:[%s273] sm:$0xf]
      %v281 = vld [vmem:[%s273 + $0x4] sm:$0xf]
      %v282 = vld [vmem:[%s273 + $0x8] sm:$0xf]
      %v283 = vld [vmem:[%s273 + $0xc] sm:$0xf]
      %v284 = vld [vmem:[%s273 + $0x10] sm:$0xf]
      %v285 = vld [vmem:[%s273 + $0x14] sm:$0xf]
      %v286 = vld [vmem:[%s273 + $0x18] sm:$0xf]
      %v287 = vld [vmem:[%s273 + $0x1c] sm:$0xf]
      %v288 = vld [vmem:[%s273 + $0x20] sm:$0xf]
      %v289 = vld [vmem:[%s273 + $0x24] sm:$0xf]
      %v290 = vld [vmem:[%s273 + $0x28] sm:$0xf]
      %v291 = vld [vmem:[%s273 + $0x2c] sm:$0xf]
      %v292 = vld [vmem:[%s273 + $0x30] sm:$0xf]
      %v293 = vld [vmem:[%s273 + $0x34] sm:$0xf]
      %v294 = vld [vmem:[%s273 + $0x38] sm:$0xf]
      %v295 = vld [vmem:[%s273 + $0x3c] sm:$0xf]
      %v296 = vld [vmem:[%s273 + $0x40] sm:$0xf]
      %v297 = vld [vmem:[%s273 + $0x44] sm:$0xf]
      %v298 = vld [vmem:[%s273 + $0x48] sm:$0xf]
      %v299 = vld [vmem:[%s273 + $0x4c] sm:$0xf]
      %v300 = vld [vmem:[%s273 + $0x50] sm:$0xf]
      %v301 = vld [vmem:[%s273 + $0x54] sm:$0xf]
      %v302 = vld [vmem:[%s273 + $0x58] sm:$0xf]
      %v303 = vld [vmem:[%s273 + $0x5c] sm:$0xf]
      %v304 = vld [vmem:[%s273 + $0x60] sm:$0xf]
      %v305 = vld [vmem:[%s273 + $0x64] sm:$0xf]
      %v306 = vld [vmem:[%s273 + $0x68] sm:$0xf]
      %v307 = vld [vmem:[%s273 + $0x6c] sm:$0xf]
      %v308 = vld [vmem:[%s273 + $0x70] sm:$0xf]
      %v309 = vld [vmem:[%s273 + $0x74] sm:$0xf]
      %v310 = vld [vmem:[%s273 + $0x78] sm:$0xf]
      %v311 = vld [vmem:[%s273 + $0x7c] sm:$0xf]
      %v312 = vld [vmem:[%s1] sm:$0x3]
      %v313 = vld [vmem:[%s2] sm:$0x1]
      %v315 = vlaneseq
      %v316 = vshrl.u32 %v315, 7
      %v317 = vsub.s32 0, %v316
      %v318 = vrot.slane %v313, %v317
      %v352 = vunpack.c.l.b16 %v280
      %v353 = vunpack.c.l.b16 %v281
      %v354 = vunpack.c.l.b16 %v282
      %v355 = vunpack.c.l.b16 %v283
      %v356 = vunpack.c.l.b16 %v284
      %v357 = vunpack.c.l.b16 %v285
      %v358 = vunpack.c.l.b16 %v286
      %v359 = vunpack.c.l.b16 %v287
      %v360 = vunpack.c.l.b16 %v288
      %v361 = vunpack.c.l.b16 %v289
      %v362 = vunpack.c.l.b16 %v290
      %v363 = vunpack.c.l.b16 %v291
      %v364 = vunpack.c.l.b16 %v292
      %v365 = vunpack.c.l.b16 %v293
      %v366 = vunpack.c.l.b16 %v294
      %v367 = vunpack.c.l.b16 %v295
      %v368 = vunpack.c.l.b16 %v296
      %v369 = vunpack.c.l.b16 %v297
      %v370 = vunpack.c.l.b16 %v298
      %v371 = vunpack.c.l.b16 %v299
      %v372 = vunpack.c.l.b16 %v300
      %v373 = vunpack.c.l.b16 %v301
      %v374 = vunpack.c.l.b16 %v302
      %v375 = vunpack.c.l.b16 %v303
      %v376 = vunpack.c.l.b16 %v304
      %v377 = vunpack.c.l.b16 %v305
      %v378 = vunpack.c.l.b16 %v306
      %v379 = vunpack.c.l.b16 %v307
      %v380 = vunpack.c.l.b16 %v308
      %v381 = vunpack.c.l.b16 %v309
      %v382 = vunpack.c.l.b16 %v310
      %v383 = vunpack.c.l.b16 %v311
      %v384 = vpack.c.b16 %v353, %v352
      %v385 = vpack.c.b16 %v355, %v354
      %v386 = vpack.c.b16 %v357, %v356
      %v387 = vpack.c.b16 %v359, %v358
      %v388 = vpack.c.b16 %v361, %v360
      %v389 = vpack.c.b16 %v363, %v362
      %v390 = vpack.c.b16 %v365, %v364
      %v391 = vpack.c.b16 %v367, %v366
      %v392 = vpack.c.b16 %v369, %v368
      %v393 = vpack.c.b16 %v371, %v370
      %v394 = vpack.c.b16 %v373, %v372
      %v395 = vpack.c.b16 %v375, %v374
      %v396 = vpack.c.b16 %v377, %v376
      %v397 = vpack.c.b16 %v379, %v378
      %v398 = vpack.c.b16 %v381, %v380
      %v399 = vpack.c.b16 %v383, %v382
      %vm400 = vcmask 31744
      %v402 = vsel %vm400, %v384, 0
      %v405 = vsel %vm400, %v385, 0
      %v408 = vsel %vm400, %v386, 0
      %v411 = vsel %vm400, %v387, 0
      %v414 = vsel %vm400, %v388, 0
      %v417 = vsel %vm400, %v389, 0
      %v420 = vsel %vm400, %v390, 0
      %v423 = vsel %vm400, %v391, 0
      %v426 = vsel %vm400, %v392, 0
      %v429 = vsel %vm400, %v393, 0
      %v432 = vsel %vm400, %v394, 0
      %v435 = vsel %vm400, %v395, 0
      %v438 = vsel %vm400, %v396, 0
      %v441 = vsel %vm400, %v397, 0
      %v444 = vsel %vm400, %v398, 0
      %v447 = vsel %vm400, %v399, 0
      %vm449 = vcmask 1041408
      %v451 = vsel %vm449, %v312, 0
      %453 = vmatprep.subr.bf16.mxu0 0
      %454 = vmatpush1.bf16.msra.mxu0 %v451
      %455 = vmatprep.subr.bf16.mxu0 0
      %456 = vmatpush1.bf16.msra.mxu0 0
      %457 = vmatprep.subr.bf16.mxu0 0
      %458 = vmatpush1.bf16.msra.mxu0 0
      %459 = vmatprep.subr.bf16.mxu0 0
      %460 = vmatpush1.bf16.msra.mxu0 0
      %461 = vmatprep.subr.bf16.mxu0 0
      %462 = vmatpush1.bf16.msra.mxu0 0
      %463 = vmatprep.subr.bf16.mxu0 0
      %464 = vmatpush1.bf16.msra.mxu0 0
      %465 = vmatprep.subr.bf16.mxu0 0
      %466 = vmatpush1.bf16.msra.mxu0 0
      %467 = vmatprep.subr.bf16.mxu0 0
      %468 = vmatpush1.bf16.msra.mxu0 0
      %469 = vmatprep.subr.bf16.mxu0 0
      %470 = vmatpush1.bf16.msra.mxu0 0
      %471 = vmatprep.subr.bf16.mxu0 0
      %472 = vmatpush1.bf16.msra.mxu0 0
      %473 = vmatprep.subr.bf16.mxu0 0
      %474 = vmatpush1.bf16.msra.mxu0 0
      %475 = vmatprep.subr.bf16.mxu0 0
      %476 = vmatpush1.bf16.msra.mxu0 0
      %477 = vmatprep.subr.bf16.mxu0 0
      %478 = vmatpush1.bf16.msra.mxu0 0
      %479 = vmatprep.subr.bf16.mxu0 0
      %480 = vmatpush1.bf16.msra.mxu0 0
      %481 = vmatprep.subr.bf16.mxu0 0
      %482 = vmatpush1.bf16.msra.mxu0 0
      %483 = vmatprep.subr.bf16.mxu0 0
      %484 = vmatpush1.bf16.msra.mxu0 0
      %485 = vmatprep.mubr.bf16.mxu0 0
      %486 = vmatmul.mubr.bf16.gmra.mrb[0].mxu0 %v402
      %v487 = vpop.f32.mrb[0].mxu0
      %v488 = vadd.f32 %v318, %v487
      %v489 = vpop.f32.mrb[0].mxu0
      %v490 = vpop.f32.mrb[0].mxu0
      %v491 = vadd.f32 %v318, %v490
      %v492 = vpop.f32.mrb[0].mxu0
      %493 = vmatprep.mubr.bf16.mxu0 0
      %494 = vmatmul.mubr.bf16.gmra.mrb[0].mxu0 %v405
      %v495 = vpop.f32.mrb[0].mxu0
      %v496 = vadd.f32 %v318, %v495
      %v497 = vpop.f32.mrb[0].mxu0
      %v498 = vpop.f32.mrb[0].mxu0
      %v499 = vadd.f32 %v318, %v498
      %v500 = vpop.f32.mrb[0].mxu0
      %501 = vmatprep.mubr.bf16.mxu0 0
      %502 = vmatmul.mubr.bf16.gmra.mrb[0].mxu0 %v408
      %v503 = vpop.f32.mrb[0].mxu0
      %v504 = vadd.f32 %v318, %v503
      %v505 = vpop.f32.mrb[0].mxu0
      %v506 = vpop.f32.mrb[0].mxu0
      %v507 = vadd.f32 %v318, %v506
      %v508 = vpop.f32.mrb[0].mxu0
      %509 = vmatprep.mubr.bf16.mxu0 0
      %510 = vmatmul.mubr.bf16.gmra.mrb[0].mxu0 %v411
      %v511 = vpop.f32.mrb[0].mxu0
      %v512 = vadd.f32 %v318, %v511
      %v513 = vpop.f32.mrb[0].mxu0
      %v514 = vpop.f32.mrb[0].mxu0
      %v515 = vadd.f32 %v318, %v514
      %v516 = vpop.f32.mrb[0].mxu0
      %517 = vmatprep.mubr.bf16.mxu0 0
      %518 = vmatmul.mubr.bf16.gmra.mrb[0].mxu0 %v414
      %v519 = vpop.f32.mrb[0].mxu0
      %v520 = vadd.f32 %v318, %v519
      %v521 = vpop.f32.mrb[0].mxu0
      %v522 = vpop.f32.mrb[0].mxu0
      %v523 = vadd.f32 %v318, %v522
      %v524 = vpop.f32.mrb[0].mxu0
      %525 = vmatprep.mubr.bf16.mxu0 0
      %526 = vmatmul.mubr.bf16.gmra.mrb[0].mxu0 %v417
      %v527 = vpop.f32.mrb[0].mxu0
      %v528 = vadd.f32 %v318, %v527
      %v529 = vpop.f32.mrb[0].mxu0
      %v530 = vpop.f32.mrb[0].mxu0
      %v531 = vadd.f32 %v318, %v530
      %v532 = vpop.f32.mrb[0].mxu0
      %533 = vmatprep.mubr.bf16.mxu0 0
      %534 = vmatmul.mubr.bf16.gmra.mrb[0].mxu0 %v420
      %v535 = vpop.f32.mrb[0].mxu0
      %v536 = vadd.f32 %v318, %v535
      %v537 = vpop.f32.mrb[0].mxu0
      %v538 = vpop.f32.mrb[0].mxu0
      %v539 = vadd.f32 %v318, %v538
      %v540 = vpop.f32.mrb[0].mxu0
      %541 = vmatprep.mubr.bf16.mxu0 0
      %542 = vmatmul.mubr.bf16.gmra.mrb[0].mxu0 %v423
      %v543 = vpop.f32.mrb[0].mxu0
      %v544 = vadd.f32 %v318, %v543
      %v545 = vpop.f32.mrb[0].mxu0
      %v546 = vpop.f32.mrb[0].mxu0
      %v547 = vadd.f32 %v318, %v546
      %v548 = vpop.f32.mrb[0].mxu0
      %549 = vmatprep.mubr.bf16.mxu0 0
      %550 = vmatmul.mubr.bf16.gmra.mrb[0].mxu0 %v426
      %v551 = vpop.f32.mrb[0].mxu0
      %v552 = vadd.f32 %v318, %v551
      %v553 = vpop.f32.mrb[0].mxu0
      %v554 = vpop.f32.mrb[0].mxu0
      %v555 = vadd.f32 %v318, %v554
      %v556 = vpop.f32.mrb[0].mxu0
      %557 = vmatprep.mubr.bf16.mxu0 0
      %558 = vmatmul.mubr.bf16.gmra.mrb[0].mxu0 %v429
      %v559 = vpop.f32.mrb[0].mxu0
      %v560 = vadd.f32 %v318, %v559
      %v561 = vpop.f32.mrb[0].mxu0
      %v562 = vpop.f32.mrb[0].mxu0
      %v563 = vadd.f32 %v318, %v562
      %v564 = vpop.f32.mrb[0].mxu0
      %565 = vmatprep.mubr.bf16.mxu0 0
      %566 = vmatmul.mubr.bf16.gmra.mrb[0].mxu0 %v432
      %v567 = vpop.f32.mrb[0].mxu0
      %v568 = vadd.f32 %v318, %v567
      %v569 = vpop.f32.mrb[0].mxu0
      %v570 = vpop.f32.mrb[0].mxu0
      %v571 = vadd.f32 %v318, %v570
      %v572 = vpop.f32.mrb[0].mxu0
      %573 = vmatprep.mubr.bf16.mxu0 0
      %574 = vmatmul.mubr.bf16.gmra.mrb[0].mxu0 %v435
      %v575 = vpop.f32.mrb[0].mxu0
      %v576 = vadd.f32 %v318, %v575
      %v577 = vpop.f32.mrb[0].mxu0
      %v578 = vpop.f32.mrb[0].mxu0
      %v579 = vadd.f32 %v318, %v578
      %v580 = vpop.f32.mrb[0].mxu0
      %581 = vmatprep.mubr.bf16.mxu0 0
      %582 = vmatmul.mubr.bf16.gmra.mrb[0].mxu0 %v438
      %v583 = vpop.f32.mrb[0].mxu0
      %v584 = vadd.f32 %v318, %v583
      %v585 = vpop.f32.mrb[0].mxu0
      %v586 = vpop.f32.mrb[0].mxu0
      %v587 = vadd.f32 %v318, %v586
      %v588 = vpop.f32.mrb[0].mxu0
      %589 = vmatprep.mubr.bf16.mxu0 0
      %590 = vmatmul.mubr.bf16.gmra.mrb[0].mxu0 %v441
      %v591 = vpop.f32.mrb[0].mxu0
      %v592 = vadd.f32 %v318, %v591
      %v593 = vpop.f32.mrb[0].mxu0
      %v594 = vpop.f32.mrb[0].mxu0
      %v595 = vadd.f32 %v318, %v594
      %v596 = vpop.f32.mrb[0].mxu0
      %597 = vmatprep.mubr.bf16.mxu0 0
      %598 = vmatmul.mubr.bf16.gmra.mrb[0].mxu0 %v444
      %v599 = vpop.f32.mrb[0].mxu0
      %v600 = vadd.f32 %v318, %v599
      %v601 = vpop.f32.mrb[0].mxu0
      %v602 = vpop.f32.mrb[0].mxu0
      %v603 = vadd.f32 %v318, %v602
      %v604 = vpop.f32.mrb[0].mxu0
      %605 = vmatprep.mubr.bf16.mxu0 0
      %606 = vmatmul.mubr.bf16.gmra.mrb[0].mxu0 %v447
      %v607 = vpop.f32.mrb[0].mxu0
      %v608 = vadd.f32 %v318, %v607
      %v609 = vpop.f32.mrb[0].mxu0
      %v610 = vpop.f32.mrb[0].mxu0
      %v611 = vadd.f32 %v318, %v610
      %v612 = vpop.f32.mrb[0].mxu0
      %613 = vdwg.mxu0
      %v614 = vmax.f32 %v488, 0.0
      %v615 = vmax.f32 %v491, 0.0
      %v616 = vmax.f32 %v496, 0.0
      %v617 = vmax.f32 %v499, 0.0
      %v618 = vmax.f32 %v504, 0.0
      %v619 = vmax.f32 %v507, 0.0
      %v620 = vmax.f32 %v512, 0.0
      %v621 = vmax.f32 %v515, 0.0
      %v622 = vmax.f32 %v520, 0.0
      %v623 = vmax.f32 %v523, 0.0
      %v624 = vmax.f32 %v528, 0.0
      %v625 = vmax.f32 %v531, 0.0
      %v626 = vmax.f32 %v536, 0.0
      %v627 = vmax.f32 %v539, 0.0
      %v628 = vmax.f32 %v544, 0.0
      %v629 = vmax.f32 %v547, 0.0
      %v630 = vmax.f32 %v552, 0.0
      %v631 = vmax.f32 %v555, 0.0
      %v632 = vmax.f32 %v560, 0.0
      %v633 = vmax.f32 %v563, 0.0
      %v634 = vmax.f32 %v568, 0.0
      %v635 = vmax.f32 %v571, 0.0
      %v636 = vmax.f32 %v576, 0.0
      %v637 = vmax.f32 %v579, 0.0
      %v638 = vmax.f32 %v584, 0.0
      %v639 = vmax.f32 %v587, 0.0
      %v640 = vmax.f32 %v592, 0.0
      %v641 = vmax.f32 %v595, 0.0
      %v642 = vmax.f32 %v600, 0.0
      %v643 = vmax.f32 %v603, 0.0
      %v644 = vmax.f32 %v608, 0.0
      %v645 = vmax.f32 %v611, 0.0
      %646 = vst [vmem:[#allocation2] sm:$0xff] 0.0
      %647 = vst [vmem:[#allocation2 + $0x8] sm:$0xff] 0.0
      %648 = vst [vmem:[#allocation2 + $0x10] sm:$0x3] 0.0
      %s649 = scalar_lea.vmem [#allocation2], 408
      %650 = vst [vmem:[%s649] sm:$0xff] 0.0
      %651 = vst [vmem:[%s649 + $0x8] sm:$0xff] 0.0
      %652 = vst [vmem:[%s649 + $0x10] sm:$0x3] 0.0
      %s653 = scalar_lea.vmem [#allocation2], 24
      %654 = vst [vmem:[%s653] sm:$0x1] 0.0
      %655 = vst [vmem:[%s653 + $0x18] sm:$0x1] 0.0
      %656 = vst [vmem:[%s653 + $0x30] sm:$0x1] 0.0
      %657 = vst [vmem:[%s653 + $0x48] sm:$0x1] 0.0
      %658 = vst [vmem:[%s653 + $0x60] sm:$0x1] 0.0
      %659 = vst [vmem:[%s653 + $0x78] sm:$0x1] 0.0
      %660 = vst [vmem:[%s653 + $0x90] sm:$0x1] 0.0
      %661 = vst [vmem:[%s653 + $0xa8] sm:$0x1] 0.0
      %662 = vst [vmem:[%s653 + $0xc0] sm:$0x1] 0.0
      %663 = vst [vmem:[%s653 + $0xd8] sm:$0x1] 0.0
      %664 = vst [vmem:[%s653 + $0xf0] sm:$0x1] 0.0
      %665 = vst [vmem:[%s653 + $0x108] sm:$0x1] 0.0
      %666 = vst [vmem:[%s653 + $0x120] sm:$0x1] 0.0
      %667 = vst [vmem:[%s653 + $0x138] sm:$0x1] 0.0
      %668 = vst [vmem:[%s653 + $0x150] sm:$0x1] 0.0
      %669 = vst [vmem:[%s653 + $0x168] sm:$0x1] 0.0
      %670 = vst [vmem:[%s653 + $0x11] sm:$0x1] 0.0
      %671 = vst [vmem:[%s653 + $0x29] sm:$0x1] 0.0
      %672 = vst [vmem:[%s653 + $0x41] sm:$0x1] 0.0
      %673 = vst [vmem:[%s653 + $0x59] sm:$0x1] 0.0
      %674 = vst [vmem:[%s653 + $0x71] sm:$0x1] 0.0
      %675 = vst [vmem:[%s653 + $0x89] sm:$0x1] 0.0
      %676 = vst [vmem:[%s653 + $0xa1] sm:$0x1] 0.0
      %677 = vst [vmem:[%s653 + $0xb9] sm:$0x1] 0.0
      %678 = vst [vmem:[%s653 + $0xd1] sm:$0x1] 0.0
      %679 = vst [vmem:[%s653 + $0xe9] sm:$0x1] 0.0
      %680 = vst [vmem:[%s653 + $0x101] sm:$0x1] 0.0
      %681 = vst [vmem:[%s653 + $0x119] sm:$0x1] 0.0
      %682 = vst [vmem:[%s653 + $0x131] sm:$0x1] 0.0
      %683 = vst [vmem:[%s653 + $0x149] sm:$0x1] 0.0
      %684 = vst [vmem:[%s653 + $0x161] sm:$0x1] 0.0
      %685 = vst [vmem:[%s653 + $0x179] sm:$0x1] 0.0
      %686 = vst [vmem:[%s653 + $0x1] sm:$0xff] %v614
      %687 = vst [vmem:[%s653 + $0x9] sm:$0xff] %v615
      %688 = vst [vmem:[%s653 + $0x19] sm:$0xff] %v616
      %689 = vst [vmem:[%s653 + $0x21] sm:$0xff] %v617
      %690 = vst [vmem:[%s653 + $0x31] sm:$0xff] %v618
      %691 = vst [vmem:[%s653 + $0x39] sm:$0xff] %v619
      %692 = vst [vmem:[%s653 + $0x49] sm:$0xff] %v620
      %693 = vst [vmem:[%s653 + $0x51] sm:$0xff] %v621
      %694 = vst [vmem:[%s653 + $0x61] sm:$0xff] %v622
      %695 = vst [vmem:[%s653 + $0x69] sm:$0xff] %v623
      %696 = vst [vmem:[%s653 + $0x79] sm:$0xff] %v624
      %697 = vst [vmem:[%s653 + $0x81] sm:$0xff] %v625
      %698 = vst [vmem:[%s653 + $0x91] sm:$0xff] %v626
      %699 = vst [vmem:[%s653 + $0x99] sm:$0xff] %v627
      %700 = vst [vmem:[%s653 + $0xa9] sm:$0xff] %v628
      %701 = vst [vmem:[%s653 + $0xb1] sm:$0xff] %v629
      %702 = vst [vmem:[%s653 + $0xc1] sm:$0xff] %v630
      %703 = vst [vmem:[%s653 + $0xc9] sm:$0xff] %v631
      %704 = vst [vmem:[%s653 + $0xd9] sm:$0xff] %v632
      %705 = vst [vmem:[%s653 + $0xe1] sm:$0xff] %v633
      %706 = vst [vmem:[%s653 + $0xf1] sm:$0xff] %v634
      %707 = vst [vmem:[%s653 + $0xf9] sm:$0xff] %v635
      %708 = vst [vmem:[%s653 + $0x109] sm:$0xff] %v636
      %709 = vst [vmem:[%s653 + $0x111] sm:$0xff] %v637
      %710 = vst [vmem:[%s653 + $0x121] sm:$0xff] %v638
      %711 = vst [vmem:[%s653 + $0x129] sm:$0xff] %v639
      %712 = vst [vmem:[%s653 + $0x139] sm:$0xff] %v640
      %713 = vst [vmem:[%s653 + $0x141] sm:$0xff] %v641
      %714 = vst [vmem:[%s653 + $0x151] sm:$0xff] %v642
      %715 = vst [vmem:[%s653 + $0x159] sm:$0xff] %v643
      %716 = vst [vmem:[%s653 + $0x169] sm:$0xff] %v644
      %717 = vst [vmem:[%s653 + $0x171] sm:$0xff] %v645
      %v718 = vld [vmem:[%s3] sm:$0xff]
      %v719 = vld [vmem:[%s3 + $0x8] sm:$0x1]
      %v720 = vld [vmem:[#allocation2] sm:$0xff]
      %v721 = vld [vmem:[#allocation2 + $0x8] sm:$0xff]
      %v722 = vld [vmem:[#allocation2 + $0x18] sm:$0xff]
      %v723 = vld [vmem:[#allocation2 + $0x20] sm:$0xff]
      %v724 = vld [vmem:[#allocation2 + $0x30] sm:$0xff]
      %v725 = vld [vmem:[#allocation2 + $0x38] sm:$0xff]
      %v726 = vld [vmem:[#allocation2 + $0x48] sm:$0xff]
      %v727 = vld [vmem:[#allocation2 + $0x50] sm:$0xff]
      %v728 = vld [vmem:[#allocation2 + $0x60] sm:$0xff]
      %v729 = vld [vmem:[#allocation2 + $0x68] sm:$0xff]
      %v730 = vld [vmem:[#allocation2 + $0x78] sm:$0xff]
      %v731 = vld [vmem:[#allocation2 + $0x80] sm:$0xff]
      %v732 = vld [vmem:[#allocation2 + $0x90] sm:$0xff]
      %v733 = vld [vmem:[#allocation2 + $0x98] sm:$0xff]
      %v734 = vld [vmem:[#allocation2 + $0xa8] sm:$0xff]
      %v735 = vld [vmem:[#allocation2 + $0xb0] sm:$0xff]
      %v736 = vld [vmem:[#allocation2 + $0xc0] sm:$0xff]
      %v737 = vld [vmem:[#allocation2 + $0xc8] sm:$0xff]
      %v738 = vld [vmem:[#allocation2 + $0xd8] sm:$0xff]
      %v739 = vld [vmem:[#allocation2 + $0xe0] sm:$0xff]
      %v740 = vld [vmem:[#allocation2 + $0xf0] sm:$0xff]
      %v741 = vld [vmem:[#allocation2 + $0xf8] sm:$0xff]
      %v742 = vld [vmem:[#allocation2 + $0x108] sm:$0xff]
      %v743 = vld [vmem:[#allocation2 + $0x110] sm:$0xff]
      %v744 = vld [vmem:[#allocation2 + $0x120] sm:$0xff]
      %v745 = vld [vmem:[#allocation2 + $0x128] sm:$0xff]
      %v746 = vld [vmem:[#allocation2 + $0x138] sm:$0xff]
      %v747 = vld [vmem:[#allocation2 + $0x140] sm:$0xff]
      %v748 = vld [vmem:[#allocation2 + $0x150] sm:$0xff]
      %v749 = vld [vmem:[#allocation2 + $0x158] sm:$0xff]
      %v750 = vld [vmem:[#allocation2 + $0x168] sm:$0xff]
      %v751 = vld [vmem:[#allocation2 + $0x170] sm:$0xff]
      %v752 = vlaneseq
      %v753 = vshrl.u32 %v752, 7
      %v754 = vsub.s32 0, %v753
      %v755 = vrot.slane %v718, %v754
      %v756 = vmul.f32 %v720, %v755
      %v757 = vmul.f32 %v721, %v755
      %v758 = vmul.f32 %v722, %v755
      %v759 = vmul.f32 %v723, %v755
      %v760 = vmul.f32 %v724, %v755
      %v761 = vmul.f32 %v725, %v755
      %v762 = vmul.f32 %v726, %v755
      %v763 = vmul.f32 %v727, %v755
      %v764 = vmul.f32 %v728, %v755
      %v765 = vmul.f32 %v729, %v755
      %v766 = vmul.f32 %v730, %v755
      %v767 = vmul.f32 %v731, %v755
      %v768 = vmul.f32 %v732, %v755
      %v769 = vmul.f32 %v733, %v755
      %v770 = vmul.f32 %v734, %v755
      %v771 = vmul.f32 %v735, %v755
      %v772 = vmul.f32 %v736, %v755
      %v773 = vmul.f32 %v737, %v755
      %v774 = vmul.f32 %v738, %v755
      %v775 = vmul.f32 %v739, %v755
      %v776 = vmul.f32 %v740, %v755
      %v777 = vmul.f32 %v741, %v755
      %v778 = vmul.f32 %v742, %v755
      %v779 = vmul.f32 %v743, %v755
      %v780 = vmul.f32 %v744, %v755
      %v781 = vmul.f32 %v745, %v755
      %v782 = vmul.f32 %v746, %v755
      %v783 = vmul.f32 %v747, %v755
      %v784 = vmul.f32 %v748, %v755
      %v785 = vmul.f32 %v749, %v755
      %v786 = vmul.f32 %v750, %v755
      %v787 = vmul.f32 %v751, %v755
      %v788 = vld [vmem:[#allocation2 + $0x1] sm:$0xff]
      %v789 = vld [vmem:[#allocation2 + $0x9] sm:$0xff]
      %v790 = vld [vmem:[#allocation2 + $0x19] sm:$0xff]
      %v791 = vld [vmem:[#allocation2 + $0x21] sm:$0xff]
      %v792 = vld [vmem:[#allocation2 + $0x31] sm:$0xff]
      %v793 = vld [vmem:[#allocation2 + $0x39] sm:$0xff]
      %v794 = vld [vmem:[#allocation2 + $0x49] sm:$0xff]
      %v795 = vld [vmem:[#allocation2 + $0x51] sm:$0xff]
      %v796 = vld [vmem:[#allocation2 + $0x61] sm:$0xff]
      %v797 = vld [vmem:[#allocation2 + $0x69] sm:$0xff]
      %v798 = vld [vmem:[#allocation2 + $0x79] sm:$0xff]
      %v799 = vld [vmem:[#allocation2 + $0x81] sm:$0xff]
      %v800 = vld [vmem:[#allocation2 + $0x91] sm:$0xff]
      %v801 = vld [vmem:[#allocation2 + $0x99] sm:$0xff]
      %v802 = vld [vmem:[#allocation2 + $0xa9] sm:$0xff]
      %v803 = vld [vmem:[#allocation2 + $0xb1] sm:$0xff]
      %v804 = vld [vmem:[#allocation2 + $0xc1] sm:$0xff]
      %v805 = vld [vmem:[#allocation2 + $0xc9] sm:$0xff]
      %v806 = vld [vmem:[#allocation2 + $0xd9] sm:$0xff]
      %v807 = vld [vmem:[#allocation2 + $0xe1] sm:$0xff]
      %v808 = vld [vmem:[#allocation2 + $0xf1] sm:$0xff]
      %v809 = vld [vmem:[#allocation2 + $0xf9] sm:$0xff]
      %v810 = vld [vmem:[#allocation2 + $0x109] sm:$0xff]
      %v811 = vld [vmem:[#allocation2 + $0x111] sm:$0xff]
      %v812 = vld [vmem:[#allocation2 + $0x121] sm:$0xff]
      %v813 = vld [vmem:[#allocation2 + $0x129] sm:$0xff]
      %v814 = vld [vmem:[#allocation2 + $0x139] sm:$0xff]
      %v815 = vld [vmem:[#allocation2 + $0x141] sm:$0xff]
      %v816 = vld [vmem:[#allocation2 + $0x151] sm:$0xff]
      %v817 = vld [vmem:[#allocation2 + $0x159] sm:$0xff]
      %v818 = vld [vmem:[#allocation2 + $0x169] sm:$0xff]
      %v819 = vld [vmem:[#allocation2 + $0x171] sm:$0xff]
      %v820 = vlaneseq
      %v821 = vshrl.u32 %v820, 7
      %v822 = vsub.s32 1, %v821
      %v823 = vrot.slane %v718, %v822
      %v824 = vmul.f32 %v788, %v823
      %v825 = vmul.f32 %v789, %v823
      %v826 = vmul.f32 %v790, %v823
      %v827 = vmul.f32 %v791, %v823
      %v828 = vmul.f32 %v792, %v823
      %v829 = vmul.f32 %v793, %v823
      %v830 = vmul.f32 %v794, %v823
      %v831 = vmul.f32 %v795, %v823
      %v832 = vmul.f32 %v796, %v823
      %v833 = vmul.f32 %v797, %v823
      %v834 = vmul.f32 %v798, %v823
      %v835 = vmul.f32 %v799, %v823
      %v836 = vmul.f32 %v800, %v823
      %v837 = vmul.f32 %v801, %v823
      %v838 = vmul.f32 %v802, %v823
      %v839 = vmul.f32 %v803, %v823
      %v840 = vmul.f32 %v804, %v823
      %v841 = vmul.f32 %v805, %v823
      %v842 = vmul.f32 %v806, %v823
      %v843 = vmul.f32 %v807, %v823
      %v844 = vmul.f32 %v808, %v823
      %v845 = vmul.f32 %v809, %v823
      %v846 = vmul.f32 %v810, %v823
      %v847 = vmul.f32 %v811, %v823
      %v848 = vmul.f32 %v812, %v823
      %v849 = vmul.f32 %v813, %v823
      %v850 = vmul.f32 %v814, %v823
      %v851 = vmul.f32 %v815, %v823
      %v852 = vmul.f32 %v816, %v823
      %v853 = vmul.f32 %v817, %v823
      %v854 = vmul.f32 %v818, %v823
      %v855 = vmul.f32 %v819, %v823
      %v856 = vadd.f32 %v756, %v824
      %v857 = vadd.f32 %v757, %v825
      %v858 = vadd.f32 %v758, %v826
      %v859 = vadd.f32 %v759, %v827
      %v860 = vadd.f32 %v760, %v828
      %v861 = vadd.f32 %v761, %v829
      %v862 = vadd.f32 %v762, %v830
      %v863 = vadd.f32 %v763, %v831
      %v864 = vadd.f32 %v764, %v832
      %v865 = vadd.f32 %v765, %v833
      %v866 = vadd.f32 %v766, %v834
      %v867 = vadd.f32 %v767, %v835
      %v868 = vadd.f32 %v768, %v836
      %v869 = vadd.f32 %v769, %v837
      %v870 = vadd.f32 %v770, %v838
      %v871 = vadd.f32 %v771, %v839
      %v872 = vadd.f32 %v772, %v840
      %v873 = vadd.f32 %v773, %v841
      %v874 = vadd.f32 %v774, %v842
      %v875 = vadd.f32 %v775, %v843
      %v876 = vadd.f32 %v776, %v844
      %v877 = vadd.f32 %v777, %v845
      %v878 = vadd.f32 %v778, %v846
      %v879 = vadd.f32 %v779, %v847
      %v880 = vadd.f32 %v780, %v848
      %v881 = vadd.f32 %v781, %v849
      %v882 = vadd.f32 %v782, %v850
      %v883 = vadd.f32 %v783, %v851
      %v884 = vadd.f32 %v784, %v852
      %v885 = vadd.f32 %v785, %v853
      %v886 = vadd.f32 %v786, %v854
      %v887 = vadd.f32 %v787, %v855
      %v888 = vld [vmem:[#allocation2 + $0x2] sm:$0xff]
      %v889 = vld [vmem:[#allocation2 + $0xa] sm:$0xff]
      %v890 = vld [vmem:[#allocation2 + $0x1a] sm:$0xff]
      %v891 = vld [vmem:[#allocation2 + $0x22] sm:$0xff]
      %v892 = vld [vmem:[#allocation2 + $0x32] sm:$0xff]
      %v893 = vld [vmem:[#allocation2 + $0x3a] sm:$0xff]
      %v894 = vld [vmem:[#allocation2 + $0x4a] sm:$0xff]
      %v895 = vld [vmem:[#allocation2 + $0x52] sm:$0xff]
      %v896 = vld [vmem:[#allocation2 + $0x62] sm:$0xff]
      %v897 = vld [vmem:[#allocation2 + $0x6a] sm:$0xff]
      %v898 = vld [vmem:[#allocation2 + $0x7a] sm:$0xff]
      %v899 = vld [vmem:[#allocation2 + $0x82] sm:$0xff]
      %v900 = vld [vmem:[#allocation2 + $0x92] sm:$0xff]
      %v901 = vld [vmem:[#allocation2 + $0x9a] sm:$0xff]
      %v902 = vld [vmem:[#allocation2 + $0xaa] sm:$0xff]
      %v903 = vld [vmem:[#allocation2 + $0xb2] sm:$0xff]
      %v904 = vld [vmem:[#allocation2 + $0xc2] sm:$0xff]
      %v905 = vld [vmem:[#allocation2 + $0xca] sm:$0xff]
      %v906 = vld [vmem:[#allocation2 + $0xda] sm:$0xff]
      %v907 = vld [vmem:[#allocation2 + $0xe2] sm:$0xff]
      %v908 = vld [vmem:[#allocation2 + $0xf2] sm:$0xff]
      %v909 = vld [vmem:[#allocation2 + $0xfa] sm:$0xff]
      %v910 = vld [vmem:[#allocation2 + $0x10a] sm:$0xff]
      %v911 = vld [vmem:[#allocation2 + $0x112] sm:$0xff]
      %v912 = vld [vmem:[#allocation2 + $0x122] sm:$0xff]
      %v913 = vld [vmem:[#allocation2 + $0x12a] sm:$0xff]
      %v914 = vld [vmem:[#allocation2 + $0x13a] sm:$0xff]
      %v915 = vld [vmem:[#allocation2 + $0x142] sm:$0xff]
      %v916 = vld [vmem:[#allocation2 + $0x152] sm:$0xff]
      %v917 = vld [vmem:[#allocation2 + $0x15a] sm:$0xff]
      %v918 = vld [vmem:[#allocation2 + $0x16a] sm:$0xff]
      %v919 = vld [vmem:[#allocation2 + $0x172] sm:$0xff]
      %v920 = vlaneseq
      %v921 = vshrl.u32 %v920, 7
      %v922 = vsub.s32 2, %v921
      %v923 = vrot.slane %v718, %v922
      %v924 = vmul.f32 %v888, %v923
      %v925 = vmul.f32 %v889, %v923
      %v926 = vmul.f32 %v890, %v923
      %v927 = vmul.f32 %v891, %v923
      %v928 = vmul.f32 %v892, %v923
      %v929 = vmul.f32 %v893, %v923
      %v930 = vmul.f32 %v894, %v923
      %v931 = vmul.f32 %v895, %v923
      %v932 = vmul.f32 %v896, %v923
      %v933 = vmul.f32 %v897, %v923
      %v934 = vmul.f32 %v898, %v923
      %v935 = vmul.f32 %v899, %v923
      %v936 = vmul.f32 %v900, %v923
      %v937 = vmul.f32 %v901, %v923
      %v938 = vmul.f32 %v902, %v923
      %v939 = vmul.f32 %v903, %v923
      %v940 = vmul.f32 %v904, %v923
      %v941 = vmul.f32 %v905, %v923
      %v942 = vmul.f32 %v906, %v923
      %v943 = vmul.f32 %v907, %v923
      %v944 = vmul.f32 %v908, %v923
      %v945 = vmul.f32 %v909, %v923
      %v946 = vmul.f32 %v910, %v923
      %v947 = vmul.f32 %v911, %v923
      %v948 = vmul.f32 %v912, %v923
      %v949 = vmul.f32 %v913, %v923
      %v950 = vmul.f32 %v914, %v923
      %v951 = vmul.f32 %v915, %v923
      %v952 = vmul.f32 %v916, %v923
      %v953 = vmul.f32 %v917, %v923
      %v954 = vmul.f32 %v918, %v923
      %v955 = vmul.f32 %v919, %v923
      %v956 = vadd.f32 %v856, %v924
      %v957 = vadd.f32 %v857, %v925
      %v958 = vadd.f32 %v858, %v926
      %v959 = vadd.f32 %v859, %v927
      %v960 = vadd.f32 %v860, %v928
      %v961 = vadd.f32 %v861, %v929
      %v962 = vadd.f32 %v862, %v930
      %v963 = vadd.f32 %v863, %v931
      %v964 = vadd.f32 %v864, %v932
      %v965 = vadd.f32 %v865, %v933
      %v966 = vadd.f32 %v866, %v934
      %v967 = vadd.f32 %v867, %v935
      %v968 = vadd.f32 %v868, %v936
      %v969 = vadd.f32 %v869, %v937
      %v970 = vadd.f32 %v870, %v938
      %v971 = vadd.f32 %v871, %v939
      %v972 = vadd.f32 %v872, %v940
      %v973 = vadd.f32 %v873, %v941
      %v974 = vadd.f32 %v874, %v942
      %v975 = vadd.f32 %v875, %v943
      %v976 = vadd.f32 %v876, %v944
      %v977 = vadd.f32 %v877, %v945
      %v978 = vadd.f32 %v878, %v946
      %v979 = vadd.f32 %v879, %v947
      %v980 = vadd.f32 %v880, %v948
      %v981 = vadd.f32 %v881, %v949
      %v982 = vadd.f32 %v882, %v950
      %v983 = vadd.f32 %v883, %v951
      %v984 = vadd.f32 %v884, %v952
      %v985 = vadd.f32 %v885, %v953
      %v986 = vadd.f32 %v886, %v954
      %v987 = vadd.f32 %v887, %v955
      %v988 = vld [vmem:[%s653] sm:$0xff]
      %v989 = vld [vmem:[%s653 + $0x8] sm:$0xff]
      %v990 = vld [vmem:[%s653 + $0x18] sm:$0xff]
      %v991 = vld [vmem:[%s653 + $0x20] sm:$0xff]
      %v992 = vld [vmem:[%s653 + $0x30] sm:$0xff]
      %v993 = vld [vmem:[%s653 + $0x38] sm:$0xff]
      %v994 = vld [vmem:[%s653 + $0x48] sm:$0xff]
      %v995 = vld [vmem:[%s653 + $0x50] sm:$0xff]
      %v996 = vld [vmem:[%s653 + $0x60] sm:$0xff]
      %v997 = vld [vmem:[%s653 + $0x68] sm:$0xff]
      %v998 = vld [vmem:[%s653 + $0x78] sm:$0xff]
      %v999 = vld [vmem:[%s653 + $0x80] sm:$0xff]
      %v1000 = vld [vmem:[%s653 + $0x90] sm:$0xff]
      %v1001 = vld [vmem:[%s653 + $0x98] sm:$0xff]
      %v1002 = vld [vmem:[%s653 + $0xa8] sm:$0xff]
      %v1003 = vld [vmem:[%s653 + $0xb0] sm:$0xff]
      %v1004 = vld [vmem:[%s653 + $0xc0] sm:$0xff]
      %v1005 = vld [vmem:[%s653 + $0xc8] sm:$0xff]
      %v1006 = vld [vmem:[%s653 + $0xd8] sm:$0xff]
      %v1007 = vld [vmem:[%s653 + $0xe0] sm:$0xff]
      %v1008 = vld [vmem:[%s653 + $0xf0] sm:$0xff]
      %v1009 = vld [vmem:[%s653 + $0xf8] sm:$0xff]
      %v1010 = vld [vmem:[%s653 + $0x108] sm:$0xff]
      %v1011 = vld [vmem:[%s653 + $0x110] sm:$0xff]
      %v1012 = vld [vmem:[%s653 + $0x120] sm:$0xff]
      %v1013 = vld [vmem:[%s653 + $0x128] sm:$0xff]
      %v1014 = vld [vmem:[%s653 + $0x138] sm:$0xff]
      %v1015 = vld [vmem:[%s653 + $0x140] sm:$0xff]
      %v1016 = vld [vmem:[%s653 + $0x150] sm:$0xff]
      %v1017 = vld [vmem:[%s653 + $0x158] sm:$0xff]
      %v1018 = vld [vmem:[%s653 + $0x168] sm:$0xff]
      %v1019 = vld [vmem:[%s653 + $0x170] sm:$0xff]
      %v1020 = vlaneseq
      %v1021 = vshrl.u32 %v1020, 7
      %v1022 = vsub.s32 3, %v1021
      %v1023 = vrot.slane %v718, %v1022
      %v1024 = vmul.f32 %v988, %v1023
      %v1025 = vmul.f32 %v989, %v1023
      %v1026 = vmul.f32 %v990, %v1023
      %v1027 = vmul.f32 %v991, %v1023
      %v1028 = vmul.f32 %v992, %v1023
      %v1029 = vmul.f32 %v993, %v1023
      %v1030 = vmul.f32 %v994, %v1023
      %v1031 = vmul.f32 %v995, %v1023
      %v1032 = vmul.f32 %v996, %v1023
      %v1033 = vmul.f32 %v997, %v1023
      %v1034 = vmul.f32 %v998, %v1023
      %v1035 = vmul.f32 %v999, %v1023
      %v1036 = vmul.f32 %v1000, %v1023
      %v1037 = vmul.f32 %v1001, %v1023
      %v1038 = vmul.f32 %v1002, %v1023
      %v1039 = vmul.f32 %v1003, %v1023
      %v1040 = vmul.f32 %v1004, %v1023
      %v1041 = vmul.f32 %v1005, %v1023
      %v1042 = vmul.f32 %v1006, %v1023
      %v1043 = vmul.f32 %v1007, %v1023
      %v1044 = vmul.f32 %v1008, %v1023
      %v1045 = vmul.f32 %v1009, %v1023
      %v1046 = vmul.f32 %v1010, %v1023
      %v1047 = vmul.f32 %v1011, %v1023
      %v1048 = vmul.f32 %v1012, %v1023
      %v1049 = vmul.f32 %v1013, %v1023
      %v1050 = vmul.f32 %v1014, %v1023
      %v1051 = vmul.f32 %v1015, %v1023
      %v1052 = vmul.f32 %v1016, %v1023
      %v1053 = vmul.f32 %v1017, %v1023
      %v1054 = vmul.f32 %v1018, %v1023
      %v1055 = vmul.f32 %v1019, %v1023
      %v1056 = vadd.f32 %v956, %v1024
      %v1057 = vadd.f32 %v957, %v1025
      %v1058 = vadd.f32 %v958, %v1026
      %v1059 = vadd.f32 %v959, %v1027
      %v1060 = vadd.f32 %v960, %v1028
      %v1061 = vadd.f32 %v961, %v1029
      %v1062 = vadd.f32 %v962, %v1030
      %v1063 = vadd.f32 %v963, %v1031
      %v1064 = vadd.f32 %v964, %v1032
      %v1065 = vadd.f32 %v965, %v1033
      %v1066 = vadd.f32 %v966, %v1034
      %v1067 = vadd.f32 %v967, %v1035
      %v1068 = vadd.f32 %v968, %v1036
      %v1069 = vadd.f32 %v969, %v1037
      %v1070 = vadd.f32 %v970, %v1038
      %v1071 = vadd.f32 %v971, %v1039
      %v1072 = vadd.f32 %v972, %v1040
      %v1073 = vadd.f32 %v973, %v1041
      %v1074 = vadd.f32 %v974, %v1042
      %v1075 = vadd.f32 %v975, %v1043
      %v1076 = vadd.f32 %v976, %v1044
      %v1077 = vadd.f32 %v977, %v1045
      %v1078 = vadd.f32 %v978, %v1046
      %v1079 = vadd.f32 %v979, %v1047
      %v1080 = vadd.f32 %v980, %v1048
      %v1081 = vadd.f32 %v981, %v1049
      %v1082 = vadd.f32 %v982, %v1050
      %v1083 = vadd.f32 %v983, %v1051
      %v1084 = vadd.f32 %v984, %v1052
      %v1085 = vadd.f32 %v985, %v1053
      %v1086 = vadd.f32 %v986, %v1054
      %v1087 = vadd.f32 %v987, %v1055
      %v1088 = vld [vmem:[%s653 + $0x1] sm:$0xff]
      %v1089 = vld [vmem:[%s653 + $0x9] sm:$0xff]
      %v1090 = vld [vmem:[%s653 + $0x19] sm:$0xff]
      %v1091 = vld [vmem:[%s653 + $0x21] sm:$0xff]
      %v1092 = vld [vmem:[%s653 + $0x31] sm:$0xff]
      %v1093 = vld [vmem:[%s653 + $0x39] sm:$0xff]
      %v1094 = vld [vmem:[%s653 + $0x49] sm:$0xff]
      %v1095 = vld [vmem:[%s653 + $0x51] sm:$0xff]
      %v1096 = vld [vmem:[%s653 + $0x61] sm:$0xff]
      %v1097 = vld [vmem:[%s653 + $0x69] sm:$0xff]
      %v1098 = vld [vmem:[%s653 + $0x79] sm:$0xff]
      %v1099 = vld [vmem:[%s653 + $0x81] sm:$0xff]
      %v1100 = vld [vmem:[%s653 + $0x91] sm:$0xff]
      %v1101 = vld [vmem:[%s653 + $0x99] sm:$0xff]
      %v1102 = vld [vmem:[%s653 + $0xa9] sm:$0xff]
      %v1103 = vld [vmem:[%s653 + $0xb1] sm:$0xff]
      %v1104 = vld [vmem:[%s653 + $0xc1] sm:$0xff]
      %v1105 = vld [vmem:[%s653 + $0xc9] sm:$0xff]
      %v1106 = vld [vmem:[%s653 + $0xd9] sm:$0xff]
      %v1107 = vld [vmem:[%s653 + $0xe1] sm:$0xff]
      %v1108 = vld [vmem:[%s653 + $0xf1] sm:$0xff]
      %v1109 = vld [vmem:[%s653 + $0xf9] sm:$0xff]
      %v1110 = vld [vmem:[%s653 + $0x109] sm:$0xff]
      %v1111 = vld [vmem:[%s653 + $0x111] sm:$0xff]
      %v1112 = vld [vmem:[%s653 + $0x121] sm:$0xff]
      %v1113 = vld [vmem:[%s653 + $0x129] sm:$0xff]
      %v1114 = vld [vmem:[%s653 + $0x139] sm:$0xff]
      %v1115 = vld [vmem:[%s653 + $0x141] sm:$0xff]
      %v1116 = vld [vmem:[%s653 + $0x151] sm:$0xff]
      %v1117 = vld [vmem:[%s653 + $0x159] sm:$0xff]
      %v1118 = vld [vmem:[%s653 + $0x169] sm:$0xff]
      %v1119 = vld [vmem:[%s653 + $0x171] sm:$0xff]
      %v1120 = vlaneseq
      %v1121 = vshrl.u32 %v1120, 7
      %v1122 = vsub.s32 4, %v1121
      %v1123 = vrot.slane %v718, %v1122
      %v1124 = vmul.f32 %v1088, %v1123
      %v1125 = vmul.f32 %v1089, %v1123
      %v1126 = vmul.f32 %v1090, %v1123
      %v1127 = vmul.f32 %v1091, %v1123
      %v1128 = vmul.f32 %v1092, %v1123
      %v1129 = vmul.f32 %v1093, %v1123
      %v1130 = vmul.f32 %v1094, %v1123
      %v1131 = vmul.f32 %v1095, %v1123
      %v1132 = vmul.f32 %v1096, %v1123
      %v1133 = vmul.f32 %v1097, %v1123
      %v1134 = vmul.f32 %v1098, %v1123
      %v1135 = vmul.f32 %v1099, %v1123
      %v1136 = vmul.f32 %v1100, %v1123
      %v1137 = vmul.f32 %v1101, %v1123
      %v1138 = vmul.f32 %v1102, %v1123
      %v1139 = vmul.f32 %v1103, %v1123
      %v1140 = vmul.f32 %v1104, %v1123
      %v1141 = vmul.f32 %v1105, %v1123
      %v1142 = vmul.f32 %v1106, %v1123
      %v1143 = vmul.f32 %v1107, %v1123
      %v1144 = vmul.f32 %v1108, %v1123
      %v1145 = vmul.f32 %v1109, %v1123
      %v1146 = vmul.f32 %v1110, %v1123
      %v1147 = vmul.f32 %v1111, %v1123
      %v1148 = vmul.f32 %v1112, %v1123
      %v1149 = vmul.f32 %v1113, %v1123
      %v1150 = vmul.f32 %v1114, %v1123
      %v1151 = vmul.f32 %v1115, %v1123
      %v1152 = vmul.f32 %v1116, %v1123
      %v1153 = vmul.f32 %v1117, %v1123
      %v1154 = vmul.f32 %v1118, %v1123
      %v1155 = vmul.f32 %v1119, %v1123
      %v1156 = vadd.f32 %v1056, %v1124
      %v1157 = vadd.f32 %v1057, %v1125
      %v1158 = vadd.f32 %v1058, %v1126
      %v1159 = vadd.f32 %v1059, %v1127
      %v1160 = vadd.f32 %v1060, %v1128
      %v1161 = vadd.f32 %v1061, %v1129
      %v1162 = vadd.f32 %v1062, %v1130
      %v1163 = vadd.f32 %v1063, %v1131
      %v1164 = vadd.f32 %v1064, %v1132
      %v1165 = vadd.f32 %v1065, %v1133
      %v1166 = vadd.f32 %v1066, %v1134
      %v1167 = vadd.f32 %v1067, %v1135
      %v1168 = vadd.f32 %v1068, %v1136
      %v1169 = vadd.f32 %v1069, %v1137
      %v1170 = vadd.f32 %v1070, %v1138
      %v1171 = vadd.f32 %v1071, %v1139
      %v1172 = vadd.f32 %v1072, %v1140
      %v1173 = vadd.f32 %v1073, %v1141
      %v1174 = vadd.f32 %v1074, %v1142
      %v1175 = vadd.f32 %v1075, %v1143
      %v1176 = vadd.f32 %v1076, %v1144
      %v1177 = vadd.f32 %v1077, %v1145
      %v1178 = vadd.f32 %v1078, %v1146
      %v1179 = vadd.f32 %v1079, %v1147
      %v1180 = vadd.f32 %v1080, %v1148
      %v1181 = vadd.f32 %v1081, %v1149
      %v1182 = vadd.f32 %v1082, %v1150
      %v1183 = vadd.f32 %v1083, %v1151
      %v1184 = vadd.f32 %v1084, %v1152
      %v1185 = vadd.f32 %v1085, %v1153
      %v1186 = vadd.f32 %v1086, %v1154
      %v1187 = vadd.f32 %v1087, %v1155
      %v1188 = vld [vmem:[%s653 + $0x2] sm:$0xff]
      %v1189 = vld [vmem:[%s653 + $0xa] sm:$0xff]
      %v1190 = vld [vmem:[%s653 + $0x1a] sm:$0xff]
      %v1191 = vld [vmem:[%s653 + $0x22] sm:$0xff]
      %v1192 = vld [vmem:[%s653 + $0x32] sm:$0xff]
      %v1193 = vld [vmem:[%s653 + $0x3a] sm:$0xff]
      %v1194 = vld [vmem:[%s653 + $0x4a] sm:$0xff]
      %v1195 = vld [vmem:[%s653 + $0x52] sm:$0xff]
      %v1196 = vld [vmem:[%s653 + $0x62] sm:$0xff]
      %v1197 = vld [vmem:[%s653 + $0x6a] sm:$0xff]
      %v1198 = vld [vmem:[%s653 + $0x7a] sm:$0xff]
      %v1199 = vld [vmem:[%s653 + $0x82] sm:$0xff]
      %v1200 = vld [vmem:[%s653 + $0x92] sm:$0xff]
      %v1201 = vld [vmem:[%s653 + $0x9a] sm:$0xff]
      %v1202 = vld [vmem:[%s653 + $0xaa] sm:$0xff]
      %v1203 = vld [vmem:[%s653 + $0xb2] sm:$0xff]
      %v1204 = vld [vmem:[%s653 + $0xc2] sm:$0xff]
      %v1205 = vld [vmem:[%s653 + $0xca] sm:$0xff]
      %v1206 = vld [vmem:[%s653 + $0xda] sm:$0xff]
      %v1207 = vld [vmem:[%s653 + $0xe2] sm:$0xff]
      %v1208 = vld [vmem:[%s653 + $0xf2] sm:$0xff]
      %v1209 = vld [vmem:[%s653 + $0xfa] sm:$0xff]
      %v1210 = vld [vmem:[%s653 + $0x10a] sm:$0xff]
      %v1211 = vld [vmem:[%s653 + $0x112] sm:$0xff]
      %v1212 = vld [vmem:[%s653 + $0x122] sm:$0xff]
      %v1213 = vld [vmem:[%s653 + $0x12a] sm:$0xff]
      %v1214 = vld [vmem:[%s653 + $0x13a] sm:$0xff]
      %v1215 = vld [vmem:[%s653 + $0x142] sm:$0xff]
      %v1216 = vld [vmem:[%s653 + $0x152] sm:$0xff]
      %v1217 = vld [vmem:[%s653 + $0x15a] sm:$0xff]
      %v1218 = vld [vmem:[%s653 + $0x16a] sm:$0xff]
      %v1219 = vld [vmem:[%s653 + $0x172] sm:$0xff]
      %v1220 = vlaneseq
      %v1221 = vshrl.u32 %v1220, 7
      %v1222 = vsub.s32 5, %v1221
      %v1223 = vrot.slane %v718, %v1222
      %v1224 = vmul.f32 %v1188, %v1223
      %v1225 = vmul.f32 %v1189, %v1223
      %v1226 = vmul.f32 %v1190, %v1223
      %v1227 = vmul.f32 %v1191, %v1223
      %v1228 = vmul.f32 %v1192, %v1223
      %v1229 = vmul.f32 %v1193, %v1223
      %v1230 = vmul.f32 %v1194, %v1223
      %v1231 = vmul.f32 %v1195, %v1223
      %v1232 = vmul.f32 %v1196, %v1223
      %v1233 = vmul.f32 %v1197, %v1223
      %v1234 = vmul.f32 %v1198, %v1223
      %v1235 = vmul.f32 %v1199, %v1223
      %v1236 = vmul.f32 %v1200, %v1223
      %v1237 = vmul.f32 %v1201, %v1223
      %v1238 = vmul.f32 %v1202, %v1223
      %v1239 = vmul.f32 %v1203, %v1223
      %v1240 = vmul.f32 %v1204, %v1223
      %v1241 = vmul.f32 %v1205, %v1223
      %v1242 = vmul.f32 %v1206, %v1223
      %v1243 = vmul.f32 %v1207, %v1223
      %v1244 = vmul.f32 %v1208, %v1223
      %v1245 = vmul.f32 %v1209, %v1223
      %v1246 = vmul.f32 %v1210, %v1223
      %v1247 = vmul.f32 %v1211, %v1223
      %v1248 = vmul.f32 %v1212, %v1223
      %v1249 = vmul.f32 %v1213, %v1223
      %v1250 = vmul.f32 %v1214, %v1223
      %v1251 = vmul.f32 %v1215, %v1223
      %v1252 = vmul.f32 %v1216, %v1223
      %v1253 = vmul.f32 %v1217, %v1223
      %v1254 = vmul.f32 %v1218, %v1223
      %v1255 = vmul.f32 %v1219, %v1223
      %v1256 = vadd.f32 %v1156, %v1224
      %v1257 = vadd.f32 %v1157, %v1225
      %v1258 = vadd.f32 %v1158, %v1226
      %v1259 = vadd.f32 %v1159, %v1227
      %v1260 = vadd.f32 %v1160, %v1228
      %v1261 = vadd.f32 %v1161, %v1229
      %v1262 = vadd.f32 %v1162, %v1230
      %v1263 = vadd.f32 %v1163, %v1231
      %v1264 = vadd.f32 %v1164, %v1232
      %v1265 = vadd.f32 %v1165, %v1233
      %v1266 = vadd.f32 %v1166, %v1234
      %v1267 = vadd.f32 %v1167, %v1235
      %v1268 = vadd.f32 %v1168, %v1236
      %v1269 = vadd.f32 %v1169, %v1237
      %v1270 = vadd.f32 %v1170, %v1238
      %v1271 = vadd.f32 %v1171, %v1239
      %v1272 = vadd.f32 %v1172, %v1240
      %v1273 = vadd.f32 %v1173, %v1241
      %v1274 = vadd.f32 %v1174, %v1242
      %v1275 = vadd.f32 %v1175, %v1243
      %v1276 = vadd.f32 %v1176, %v1244
      %v1277 = vadd.f32 %v1177, %v1245
      %v1278 = vadd.f32 %v1178, %v1246
      %v1279 = vadd.f32 %v1179, %v1247
      %v1280 = vadd.f32 %v1180, %v1248
      %v1281 = vadd.f32 %v1181, %v1249
      %v1282 = vadd.f32 %v1182, %v1250
      %v1283 = vadd.f32 %v1183, %v1251
      %v1284 = vadd.f32 %v1184, %v1252
      %v1285 = vadd.f32 %v1185, %v1253
      %v1286 = vadd.f32 %v1186, %v1254
      %v1287 = vadd.f32 %v1187, %v1255
      %s1288 = scalar_lea.vmem [#allocation2], 48
      %v1289 = vld [vmem:[%s1288] sm:$0xff]
      %v1290 = vld [vmem:[%s1288 + $0x8] sm:$0xff]
      %v1291 = vld [vmem:[%s1288 + $0x18] sm:$0xff]
      %v1292 = vld [vmem:[%s1288 + $0x20] sm:$0xff]
      %v1293 = vld [vmem:[%s1288 + $0x30] sm:$0xff]
      %v1294 = vld [vmem:[%s1288 + $0x38] sm:$0xff]
      %v1295 = vld [vmem:[%s1288 + $0x48] sm:$0xff]
      %v1296 = vld [vmem:[%s1288 + $0x50] sm:$0xff]
      %v1297 = vld [vmem:[%s1288 + $0x60] sm:$0xff]
      %v1298 = vld [vmem:[%s1288 + $0x68] sm:$0xff]
      %v1299 = vld [vmem:[%s1288 + $0x78] sm:$0xff]
      %v1300 = vld [vmem:[%s1288 + $0x80] sm:$0xff]
      %v1301 = vld [vmem:[%s1288 + $0x90] sm:$0xff]
      %v1302 = vld [vmem:[%s1288 + $0x98] sm:$0xff]
      %v1303 = vld [vmem:[%s1288 + $0xa8] sm:$0xff]
      %v1304 = vld [vmem:[%s1288 + $0xb0] sm:$0xff]
      %v1305 = vld [vmem:[%s1288 + $0xc0] sm:$0xff]
      %v1306 = vld [vmem:[%s1288 + $0xc8] sm:$0xff]
      %v1307 = vld [vmem:[%s1288 + $0xd8] sm:$0xff]
      %v1308 = vld [vmem:[%s1288 + $0xe0] sm:$0xff]
      %v1309 = vld [vmem:[%s1288 + $0xf0] sm:$0xff]
      %v1310 = vld [vmem:[%s1288 + $0xf8] sm:$0xff]
      %v1311 = vld [vmem:[%s1288 + $0x108] sm:$0xff]
      %v1312 = vld [vmem:[%s1288 + $0x110] sm:$0xff]
      %v1313 = vld [vmem:[%s1288 + $0x120] sm:$0xff]
      %v1314 = vld [vmem:[%s1288 + $0x128] sm:$0xff]
      %v1315 = vld [vmem:[%s1288 + $0x138] sm:$0xff]
      %v1316 = vld [vmem:[%s1288 + $0x140] sm:$0xff]
      %v1317 = vld [vmem:[%s1288 + $0x150] sm:$0xff]
      %v1318 = vld [vmem:[%s1288 + $0x158] sm:$0xff]
      %v1319 = vld [vmem:[%s1288 + $0x168] sm:$0xff]
      %v1320 = vld [vmem:[%s1288 + $0x170] sm:$0xff]
      %v1321 = vlaneseq
      %v1322 = vshrl.u32 %v1321, 7
      %v1323 = vsub.s32 6, %v1322
      %v1324 = vrot.slane %v718, %v1323
      %v1325 = vmul.f32 %v1289, %v1324
      %v1326 = vmul.f32 %v1290, %v1324
      %v1327 = vmul.f32 %v1291, %v1324
      %v1328 = vmul.f32 %v1292, %v1324
      %v1329 = vmul.f32 %v1293, %v1324
      %v1330 = vmul.f32 %v1294, %v1324
      %v1331 = vmul.f32 %v1295, %v1324
      %v1332 = vmul.f32 %v1296, %v1324
      %v1333 = vmul.f32 %v1297, %v1324
      %v1334 = vmul.f32 %v1298, %v1324
      %v1335 = vmul.f32 %v1299, %v1324
      %v1336 = vmul.f32 %v1300, %v1324
      %v1337 = vmul.f32 %v1301, %v1324
      %v1338 = vmul.f32 %v1302, %v1324
      %v1339 = vmul.f32 %v1303, %v1324
      %v1340 = vmul.f32 %v1304, %v1324
      %v1341 = vmul.f32 %v1305, %v1324
      %v1342 = vmul.f32 %v1306, %v1324
      %v1343 = vmul.f32 %v1307, %v1324
      %v1344 = vmul.f32 %v1308, %v1324
      %v1345 = vmul.f32 %v1309, %v1324
      %v1346 = vmul.f32 %v1310, %v1324
      %v1347 = vmul.f32 %v1311, %v1324
      %v1348 = vmul.f32 %v1312, %v1324
      %v1349 = vmul.f32 %v1313, %v1324
      %v1350 = vmul.f32 %v1314, %v1324
      %v1351 = vmul.f32 %v1315, %v1324
      %v1352 = vmul.f32 %v1316, %v1324
      %v1353 = vmul.f32 %v1317, %v1324
      %v1354 = vmul.f32 %v1318, %v1324
      %v1355 = vmul.f32 %v1319, %v1324
      %v1356 = vmul.f32 %v1320, %v1324
      %v1357 = vadd.f32 %v1256, %v1325
      %v1358 = vadd.f32 %v1257, %v1326
      %v1359 = vadd.f32 %v1258, %v1327
      %v1360 = vadd.f32 %v1259, %v1328
      %v1361 = vadd.f32 %v1260, %v1329
      %v1362 = vadd.f32 %v1261, %v1330
      %v1363 = vadd.f32 %v1262, %v1331
      %v1364 = vadd.f32 %v1263, %v1332
      %v1365 = vadd.f32 %v1264, %v1333
      %v1366 = vadd.f32 %v1265, %v1334
      %v1367 = vadd.f32 %v1266, %v1335
      %v1368 = vadd.f32 %v1267, %v1336
      %v1369 = vadd.f32 %v1268, %v1337
      %v1370 = vadd.f32 %v1269, %v1338
      %v1371 = vadd.f32 %v1270, %v1339
      %v1372 = vadd.f32 %v1271, %v1340
      %v1373 = vadd.f32 %v1272, %v1341
      %v1374 = vadd.f32 %v1273, %v1342
      %v1375 = vadd.f32 %v1274, %v1343
      %v1376 = vadd.f32 %v1275, %v1344
      %v1377 = vadd.f32 %v1276, %v1345
      %v1378 = vadd.f32 %v1277, %v1346
      %v1379 = vadd.f32 %v1278, %v1347
      %v1380 = vadd.f32 %v1279, %v1348
      %v1381 = vadd.f32 %v1280, %v1349
      %v1382 = vadd.f32 %v1281, %v1350
      %v1383 = vadd.f32 %v1282, %v1351
      %v1384 = vadd.f32 %v1283, %v1352
      %v1385 = vadd.f32 %v1284, %v1353
      %v1386 = vadd.f32 %v1285, %v1354
      %v1387 = vadd.f32 %v1286, %v1355
      %v1388 = vadd.f32 %v1287, %v1356
      %v1389 = vld [vmem:[%s1288 + $0x1] sm:$0xff]
      %v1390 = vld [vmem:[%s1288 + $0x9] sm:$0xff]
      %v1391 = vld [vmem:[%s1288 + $0x19] sm:$0xff]
      %v1392 = vld [vmem:[%s1288 + $0x21] sm:$0xff]
      %v1393 = vld [vmem:[%s1288 + $0x31] sm:$0xff]
      %v1394 = vld [vmem:[%s1288 + $0x39] sm:$0xff]
      %v1395 = vld [vmem:[%s1288 + $0x49] sm:$0xff]
      %v1396 = vld [vmem:[%s1288 + $0x51] sm:$0xff]
      %v1397 = vld [vmem:[%s1288 + $0x61] sm:$0xff]
      %v1398 = vld [vmem:[%s1288 + $0x69] sm:$0xff]
      %v1399 = vld [vmem:[%s1288 + $0x79] sm:$0xff]
      %v1400 = vld [vmem:[%s1288 + $0x81] sm:$0xff]
      %v1401 = vld [vmem:[%s1288 + $0x91] sm:$0xff]
      %v1402 = vld [vmem:[%s1288 + $0x99] sm:$0xff]
      %v1403 = vld [vmem:[%s1288 + $0xa9] sm:$0xff]
      %v1404 = vld [vmem:[%s1288 + $0xb1] sm:$0xff]
      %v1405 = vld [vmem:[%s1288 + $0xc1] sm:$0xff]
      %v1406 = vld [vmem:[%s1288 + $0xc9] sm:$0xff]
      %v1407 = vld [vmem:[%s1288 + $0xd9] sm:$0xff]
      %v1408 = vld [vmem:[%s1288 + $0xe1] sm:$0xff]
      %v1409 = vld [vmem:[%s1288 + $0xf1] sm:$0xff]
      %v1410 = vld [vmem:[%s1288 + $0xf9] sm:$0xff]
      %v1411 = vld [vmem:[%s1288 + $0x109] sm:$0xff]
      %v1412 = vld [vmem:[%s1288 + $0x111] sm:$0xff]
      %v1413 = vld [vmem:[%s1288 + $0x121] sm:$0xff]
      %v1414 = vld [vmem:[%s1288 + $0x129] sm:$0xff]
      %v1415 = vld [vmem:[%s1288 + $0x139] sm:$0xff]
      %v1416 = vld [vmem:[%s1288 + $0x141] sm:$0xff]
      %v1417 = vld [vmem:[%s1288 + $0x151] sm:$0xff]
      %v1418 = vld [vmem:[%s1288 + $0x159] sm:$0xff]
      %v1419 = vld [vmem:[%s1288 + $0x169] sm:$0xff]
      %v1420 = vld [vmem:[%s1288 + $0x171] sm:$0xff]
      %v1421 = vlaneseq
      %v1422 = vshrl.u32 %v1421, 7
      %v1423 = vsub.s32 7, %v1422
      %v1424 = vrot.slane %v718, %v1423
      %v1425 = vmul.f32 %v1389, %v1424
      %v1426 = vmul.f32 %v1390, %v1424
      %v1427 = vmul.f32 %v1391, %v1424
      %v1428 = vmul.f32 %v1392, %v1424
      %v1429 = vmul.f32 %v1393, %v1424
      %v1430 = vmul.f32 %v1394, %v1424
      %v1431 = vmul.f32 %v1395, %v1424
      %v1432 = vmul.f32 %v1396, %v1424
      %v1433 = vmul.f32 %v1397, %v1424
      %v1434 = vmul.f32 %v1398, %v1424
      %v1435 = vmul.f32 %v1399, %v1424
      %v1436 = vmul.f32 %v1400, %v1424
      %v1437 = vmul.f32 %v1401, %v1424
      %v1438 = vmul.f32 %v1402, %v1424
      %v1439 = vmul.f32 %v1403, %v1424
      %v1440 = vmul.f32 %v1404, %v1424
      %v1441 = vmul.f32 %v1405, %v1424
      %v1442 = vmul.f32 %v1406, %v1424
      %v1443 = vmul.f32 %v1407, %v1424
      %v1444 = vmul.f32 %v1408, %v1424
      %v1445 = vmul.f32 %v1409, %v1424
      %v1446 = vmul.f32 %v1410, %v1424
      %v1447 = vmul.f32 %v1411, %v1424
      %v1448 = vmul.f32 %v1412, %v1424
      %v1449 = vmul.f32 %v1413, %v1424
      %v1450 = vmul.f32 %v1414, %v1424
      %v1451 = vmul.f32 %v1415, %v1424
      %v1452 = vmul.f32 %v1416, %v1424
      %v1453 = vmul.f32 %v1417, %v1424
      %v1454 = vmul.f32 %v1418, %v1424
      %v1455 = vmul.f32 %v1419, %v1424
      %v1456 = vmul.f32 %v1420, %v1424
      %v1457 = vadd.f32 %v1357, %v1425
      %v1458 = vadd.f32 %v1358, %v1426
      %v1459 = vadd.f32 %v1359, %v1427
      %v1460 = vadd.f32 %v1360, %v1428
      %v1461 = vadd.f32 %v1361, %v1429
      %v1462 = vadd.f32 %v1362, %v1430
      %v1463 = vadd.f32 %v1363, %v1431
      %v1464 = vadd.f32 %v1364, %v1432
      %v1465 = vadd.f32 %v1365, %v1433
      %v1466 = vadd.f32 %v1366, %v1434
      %v1467 = vadd.f32 %v1367, %v1435
      %v1468 = vadd.f32 %v1368, %v1436
      %v1469 = vadd.f32 %v1369, %v1437
      %v1470 = vadd.f32 %v1370, %v1438
      %v1471 = vadd.f32 %v1371, %v1439
      %v1472 = vadd.f32 %v1372, %v1440
      %v1473 = vadd.f32 %v1373, %v1441
      %v1474 = vadd.f32 %v1374, %v1442
      %v1475 = vadd.f32 %v1375, %v1443
      %v1476 = vadd.f32 %v1376, %v1444
      %v1477 = vadd.f32 %v1377, %v1445
      %v1478 = vadd.f32 %v1378, %v1446
      %v1479 = vadd.f32 %v1379, %v1447
      %v1480 = vadd.f32 %v1380, %v1448
      %v1481 = vadd.f32 %v1381, %v1449
      %v1482 = vadd.f32 %v1382, %v1450
      %v1483 = vadd.f32 %v1383, %v1451
      %v1484 = vadd.f32 %v1384, %v1452
      %v1485 = vadd.f32 %v1385, %v1453
      %v1486 = vadd.f32 %v1386, %v1454
      %v1487 = vadd.f32 %v1387, %v1455
      %v1488 = vadd.f32 %v1388, %v1456
      %v1489 = vld [vmem:[%s1288 + $0x2] sm:$0xff]
      %v1490 = vld [vmem:[%s1288 + $0xa] sm:$0xff]
      %v1491 = vld [vmem:[%s1288 + $0x1a] sm:$0xff]
      %v1492 = vld [vmem:[%s1288 + $0x22] sm:$0xff]
      %v1493 = vld [vmem:[%s1288 + $0x32] sm:$0xff]
      %v1494 = vld [vmem:[%s1288 + $0x3a] sm:$0xff]
      %v1495 = vld [vmem:[%s1288 + $0x4a] sm:$0xff]
      %v1496 = vld [vmem:[%s1288 + $0x52] sm:$0xff]
      %v1497 = vld [vmem:[%s1288 + $0x62] sm:$0xff]
      %v1498 = vld [vmem:[%s1288 + $0x6a] sm:$0xff]
      %v1499 = vld [vmem:[%s1288 + $0x7a] sm:$0xff]
      %v1500 = vld [vmem:[%s1288 + $0x82] sm:$0xff]
      %v1501 = vld [vmem:[%s1288 + $0x92] sm:$0xff]
      %v1502 = vld [vmem:[%s1288 + $0x9a] sm:$0xff]
      %v1503 = vld [vmem:[%s1288 + $0xaa] sm:$0xff]
      %v1504 = vld [vmem:[%s1288 + $0xb2] sm:$0xff]
      %v1505 = vld [vmem:[%s1288 + $0xc2] sm:$0xff]
      %v1506 = vld [vmem:[%s1288 + $0xca] sm:$0xff]
      %v1507 = vld [vmem:[%s1288 + $0xda] sm:$0xff]
      %v1508 = vld [vmem:[%s1288 + $0xe2] sm:$0xff]
      %v1509 = vld [vmem:[%s1288 + $0xf2] sm:$0xff]
      %v1510 = vld [vmem:[%s1288 + $0xfa] sm:$0xff]
      %v1511 = vld [vmem:[%s1288 + $0x10a] sm:$0xff]
      %v1512 = vld [vmem:[%s1288 + $0x112] sm:$0xff]
      %v1513 = vld [vmem:[%s1288 + $0x122] sm:$0xff]
      %v1514 = vld [vmem:[%s1288 + $0x12a] sm:$0xff]
      %v1515 = vld [vmem:[%s1288 + $0x13a] sm:$0xff]
      %v1516 = vld [vmem:[%s1288 + $0x142] sm:$0xff]
      %v1517 = vld [vmem:[%s1288 + $0x152] sm:$0xff]
      %v1518 = vld [vmem:[%s1288 + $0x15a] sm:$0xff]
      %v1519 = vld [vmem:[%s1288 + $0x16a] sm:$0xff]
      %v1520 = vld [vmem:[%s1288 + $0x172] sm:$0xff]
      %v1521 = vlaneseq
      %v1522 = vshrl.u32 %v1521, 7
      %v1523 = vsub.s32 0, %v1522
      %v1524 = vrot.slane %v719, %v1523
      %v1525 = vmul.f32 %v1489, %v1524
      %v1526 = vmul.f32 %v1490, %v1524
      %v1527 = vmul.f32 %v1491, %v1524
      %v1528 = vmul.f32 %v1492, %v1524
      %v1529 = vmul.f32 %v1493, %v1524
      %v1530 = vmul.f32 %v1494, %v1524
      %v1531 = vmul.f32 %v1495, %v1524
      %v1532 = vmul.f32 %v1496, %v1524
      %v1533 = vmul.f32 %v1497, %v1524
      %v1534 = vmul.f32 %v1498, %v1524
      %v1535 = vmul.f32 %v1499, %v1524
      %v1536 = vmul.f32 %v1500, %v1524
      %v1537 = vmul.f32 %v1501, %v1524
      %v1538 = vmul.f32 %v1502, %v1524
      %v1539 = vmul.f32 %v1503, %v1524
      %v1540 = vmul.f32 %v1504, %v1524
      %v1541 = vmul.f32 %v1505, %v1524
      %v1542 = vmul.f32 %v1506, %v1524
      %v1543 = vmul.f32 %v1507, %v1524
      %v1544 = vmul.f32 %v1508, %v1524
      %v1545 = vmul.f32 %v1509, %v1524
      %v1546 = vmul.f32 %v1510, %v1524
      %v1547 = vmul.f32 %v1511, %v1524
      %v1548 = vmul.f32 %v1512, %v1524
      %v1549 = vmul.f32 %v1513, %v1524
      %v1550 = vmul.f32 %v1514, %v1524
      %v1551 = vmul.f32 %v1515, %v1524
      %v1552 = vmul.f32 %v1516, %v1524
      %v1553 = vmul.f32 %v1517, %v1524
      %v1554 = vmul.f32 %v1518, %v1524
      %v1555 = vmul.f32 %v1519, %v1524
      %v1556 = vmul.f32 %v1520, %v1524
      %v1557 = vadd.f32 %v1457, %v1525
      %v1558 = vadd.f32 %v1458, %v1526
      %v1559 = vadd.f32 %v1459, %v1527
      %v1560 = vadd.f32 %v1460, %v1528
      %v1561 = vadd.f32 %v1461, %v1529
      %v1562 = vadd.f32 %v1462, %v1530
      %v1563 = vadd.f32 %v1463, %v1531
      %v1564 = vadd.f32 %v1464, %v1532
      %v1565 = vadd.f32 %v1465, %v1533
      %v1566 = vadd.f32 %v1466, %v1534
      %v1567 = vadd.f32 %v1467, %v1535
      %v1568 = vadd.f32 %v1468, %v1536
      %v1569 = vadd.f32 %v1469, %v1537
      %v1570 = vadd.f32 %v1470, %v1538
      %v1571 = vadd.f32 %v1471, %v1539
      %v1572 = vadd.f32 %v1472, %v1540
      %v1573 = vadd.f32 %v1473, %v1541
      %v1574 = vadd.f32 %v1474, %v1542
      %v1575 = vadd.f32 %v1475, %v1543
      %v1576 = vadd.f32 %v1476, %v1544
      %v1577 = vadd.f32 %v1477, %v1545
      %v1578 = vadd.f32 %v1478, %v1546
      %v1579 = vadd.f32 %v1479, %v1547
      %v1580 = vadd.f32 %v1480, %v1548
      %v1581 = vadd.f32 %v1481, %v1549
      %v1582 = vadd.f32 %v1482, %v1550
      %v1583 = vadd.f32 %v1483, %v1551
      %v1584 = vadd.f32 %v1484, %v1552
      %v1585 = vadd.f32 %v1485, %v1553
      %v1586 = vadd.f32 %v1486, %v1554
      %v1587 = vadd.f32 %v1487, %v1555
      %v1588 = vadd.f32 %v1488, %v1556
      %v1589 = vld [vmem:[%s4] sm:$0x1]
      %v1591 = vlaneseq
      %v1592 = vshrl.u32 %v1591, 7
      %v1593 = vsub.s32 0, %v1592
      %v1594 = vrot.slane %v1589, %v1593
      %v1596 = vadd.f32 %v1557, %v1594
      %v1597 = vadd.f32 %v1558, %v1594
      %v1598 = vadd.f32 %v1559, %v1594
      %v1599 = vadd.f32 %v1560, %v1594
      %v1600 = vadd.f32 %v1561, %v1594
      %v1601 = vadd.f32 %v1562, %v1594
      %v1602 = vadd.f32 %v1563, %v1594
      %v1603 = vadd.f32 %v1564, %v1594
      %v1604 = vadd.f32 %v1565, %v1594
      %v1605 = vadd.f32 %v1566, %v1594
      %v1606 = vadd.f32 %v1567, %v1594
      %v1607 = vadd.f32 %v1568, %v1594
      %v1608 = vadd.f32 %v1569, %v1594
      %v1609 = vadd.f32 %v1570, %v1594
      %v1610 = vadd.f32 %v1571, %v1594
      %v1611 = vadd.f32 %v1572, %v1594
      %v1612 = vadd.f32 %v1573, %v1594
      %v1613 = vadd.f32 %v1574, %v1594
      %v1614 = vadd.f32 %v1575, %v1594
      %v1615 = vadd.f32 %v1576, %v1594
      %v1616 = vadd.f32 %v1577, %v1594
      %v1617 = vadd.f32 %v1578, %v1594
      %v1618 = vadd.f32 %v1579, %v1594
      %v1619 = vadd.f32 %v1580, %v1594
      %v1620 = vadd.f32 %v1581, %v1594
      %v1621 = vadd.f32 %v1582, %v1594
      %v1622 = vadd.f32 %v1583, %v1594
      %v1623 = vadd.f32 %v1584, %v1594
      %v1624 = vadd.f32 %v1585, %v1594
      %v1625 = vadd.f32 %v1586, %v1594
      %v1626 = vadd.f32 %v1587, %v1594
      %v1627 = vadd.f32 %v1588, %v1594
      %v1628 = vmax.f32 %v1596, 0.0
      %v1629 = vmax.f32 %v1597, 0.0
      %v1630 = vmax.f32 %v1598, 0.0
      %v1631 = vmax.f32 %v1599, 0.0
      %v1632 = vmax.f32 %v1600, 0.0
      %v1633 = vmax.f32 %v1601, 0.0
      %v1634 = vmax.f32 %v1602, 0.0
      %v1635 = vmax.f32 %v1603, 0.0
      %v1636 = vmax.f32 %v1604, 0.0
      %v1637 = vmax.f32 %v1605, 0.0
      %v1638 = vmax.f32 %v1606, 0.0
      %v1639 = vmax.f32 %v1607, 0.0
      %v1640 = vmax.f32 %v1608, 0.0
      %v1641 = vmax.f32 %v1609, 0.0
      %v1642 = vmax.f32 %v1610, 0.0
      %v1643 = vmax.f32 %v1611, 0.0
      %v1644 = vmax.f32 %v1612, 0.0
      %v1645 = vmax.f32 %v1613, 0.0
      %v1646 = vmax.f32 %v1614, 0.0
      %v1647 = vmax.f32 %v1615, 0.0
      %v1648 = vmax.f32 %v1616, 0.0
      %v1649 = vmax.f32 %v1617, 0.0
      %v1650 = vmax.f32 %v1618, 0.0
      %v1651 = vmax.f32 %v1619, 0.0
      %v1652 = vmax.f32 %v1620, 0.0
      %v1653 = vmax.f32 %v1621, 0.0
      %v1654 = vmax.f32 %v1622, 0.0
      %v1655 = vmax.f32 %v1623, 0.0
      %v1656 = vmax.f32 %v1624, 0.0
      %v1657 = vmax.f32 %v1625, 0.0
      %v1658 = vmax.f32 %v1626, 0.0
      %v1659 = vmax.f32 %v1627, 0.0
      %v1660 = vpack.c.bf16 %v1629, %v1628
      %v1661 = vpack.c.bf16 %v1631, %v1630
      %v1662 = vpack.c.bf16 %v1633, %v1632
      %v1663 = vpack.c.bf16 %v1635, %v1634
      %v1664 = vpack.c.bf16 %v1637, %v1636
      %v1665 = vpack.c.bf16 %v1639, %v1638
      %v1666 = vpack.c.bf16 %v1641, %v1640
      %v1667 = vpack.c.bf16 %v1643, %v1642
      %v1668 = vpack.c.bf16 %v1645, %v1644
      %v1669 = vpack.c.bf16 %v1647, %v1646
      %v1670 = vpack.c.bf16 %v1649, %v1648
      %v1671 = vpack.c.bf16 %v1651, %v1650
      %v1672 = vpack.c.bf16 %v1653, %v1652
      %v1673 = vpack.c.bf16 %v1655, %v1654
      %v1674 = vpack.c.bf16 %v1657, %v1656
      %v1675 = vpack.c.bf16 %v1659, %v1658
      %v1676 = vld [vmem:[%s5] sm:$0xf]
      %v1677 = vld [vmem:[%s5 + $0x4] sm:$0xf]
      %v1678 = vld [vmem:[%s5 + $0x8] sm:$0xf]
      %v1679 = vld [vmem:[%s5 + $0xc] sm:$0xf]
      %v1680 = vld [vmem:[%s5 + $0x10] sm:$0xf]
      %v1681 = vld [vmem:[%s5 + $0x14] sm:$0xf]
      %v1682 = vld [vmem:[%s5 + $0x18] sm:$0xf]
      %v1683 = vld [vmem:[%s5 + $0x1c] sm:$0xf]
      %v1684 = vld [vmem:[%s5 + $0x20] sm:$0xf]
      %v1685 = vld [vmem:[%s5 + $0x24] sm:$0xf]
      %v1686 = vld [vmem:[%s5 + $0x28] sm:$0xf]
      %v1687 = vld [vmem:[%s5 + $0x2c] sm:$0xf]
      %v1688 = vld [vmem:[%s5 + $0x30] sm:$0xf]
      %v1689 = vld [vmem:[%s5 + $0x34] sm:$0xf]
      %v1690 = vld [vmem:[%s5 + $0x38] sm:$0xf]
      %v1691 = vld [vmem:[%s5 + $0x3c] sm:$0xf]
      %v1692 = vld [vmem:[%s6] sm:$0x1]
      %v1694 = vlaneseq
      %v1695 = vshrl.u32 %v1694, 7
      %v1696 = vsub.s32 0, %v1695
      %v1697 = vrot.slane %v1692, %v1696
      %v1715 = vunpack.c.l.b16 %v1676
      %v1716 = vunpack.c.l.b16 %v1677
      %v1717 = vunpack.c.l.b16 %v1678
      %v1718 = vunpack.c.l.b16 %v1679
      %v1719 = vunpack.c.l.b16 %v1680
      %v1720 = vunpack.c.l.b16 %v1681
      %v1721 = vunpack.c.l.b16 %v1682
      %v1722 = vunpack.c.l.b16 %v1683
      %v1723 = vunpack.c.l.b16 %v1684
      %v1724 = vunpack.c.l.b16 %v1685
      %v1725 = vunpack.c.l.b16 %v1686
      %v1726 = vunpack.c.l.b16 %v1687
      %v1727 = vunpack.c.l.b16 %v1688
      %v1728 = vunpack.c.l.b16 %v1689
      %v1729 = vunpack.c.l.b16 %v1690
      %v1730 = vunpack.c.l.b16 %v1691
      %v1731 = vpack.c.b16 %v1716, %v1715
      %v1732 = vpack.c.b16 %v1718, %v1717
      %v1733 = vpack.c.b16 %v1720, %v1719
      %v1734 = vpack.c.b16 %v1722, %v1721
      %v1735 = vpack.c.b16 %v1724, %v1723
      %v1736 = vpack.c.b16 %v1726, %v1725
      %v1737 = vpack.c.b16 %v1728, %v1727
      %v1738 = vpack.c.b16 %v1730, %v1729
      %1747 = vmatprep.subr.bf16.mxu0 0
      %1748 = vmatpush1.bf16.msra.mxu0 %v1731
      %1749 = vmatprep.subr.bf16.mxu0 0
      %1750 = vmatpush1.bf16.msra.mxu0 %v1732
      %1751 = vmatprep.subr.bf16.mxu0 0
      %1752 = vmatpush1.bf16.msra.mxu0 %v1733
      %1753 = vmatprep.subr.bf16.mxu0 0
      %1754 = vmatpush1.bf16.msra.mxu0 %v1734
      %1755 = vmatprep.subr.bf16.mxu0 0
      %1756 = vmatpush1.bf16.msra.mxu0 %v1735
      %1757 = vmatprep.subr.bf16.mxu0 0
      %1758 = vmatpush1.bf16.msra.mxu0 %v1736
      %1759 = vmatprep.subr.bf16.mxu0 0
      %1760 = vmatpush1.bf16.msra.mxu0 %v1737
      %1761 = vmatprep.subr.bf16.mxu0 0
      %1762 = vmatpush1.bf16.msra.mxu0 %v1738
      %1763 = vmatprep.subr.bf16.mxu0 0
      %1764 = vmatpush1.bf16.msra.mxu0 0
      %1765 = vmatprep.subr.bf16.mxu0 0
      %1766 = vmatpush1.bf16.msra.mxu0 0
      %1767 = vmatprep.subr.bf16.mxu0 0
      %1768 = vmatpush1.bf16.msra.mxu0 0
      %1769 = vmatprep.subr.bf16.mxu0 0
      %1770 = vmatpush1.bf16.msra.mxu0 0
      %1771 = vmatprep.subr.bf16.mxu0 0
      %1772 = vmatpush1.bf16.msra.mxu0 0
      %1773 = vmatprep.subr.bf16.mxu0 0
      %1774 = vmatpush1.bf16.msra.mxu0 0
      %1775 = vmatprep.subr.bf16.mxu0 0
      %1776 = vmatpush1.bf16.msra.mxu0 0
      %1777 = vmatprep.subr.bf16.mxu0 0
      %1778 = vmatpush1.bf16.msra.mxu0 0
      %1779 = vmatprep.mubr.bf16.mxu0 0
      %1780 = vmatmul.mubr.bf16.gmra.mrb[0].mxu0 %v1660
      %v1781 = vpop.f32.mrb[0].mxu0
      %v1782 = vadd.f32 %v1697, %v1781
      %v1783 = vpop.f32.mrb[0].mxu0
      %v1784 = vpop.f32.mrb[0].mxu0
      %v1785 = vadd.f32 %v1697, %v1784
      %v1786 = vpop.f32.mrb[0].mxu0
      %1787 = vmatprep.mubr.bf16.mxu0 0
      %1788 = vmatmul.mubr.bf16.gmra.mrb[0].mxu0 %v1661
      %v1789 = vpop.f32.mrb[0].mxu0
      %v1790 = vadd.f32 %v1697, %v1789
      %v1791 = vpop.f32.mrb[0].mxu0
      %v1792 = vpop.f32.mrb[0].mxu0
      %v1793 = vadd.f32 %v1697, %v1792
      %v1794 = vpop.f32.mrb[0].mxu0
      %1795 = vmatprep.mubr.bf16.mxu0 0
      %1796 = vmatmul.mubr.bf16.gmra.mrb[0].mxu0 %v1662
      %v1797 = vpop.f32.mrb[0].mxu0
      %v1798 = vadd.f32 %v1697, %v1797
      %v1799 = vpop.f32.mrb[0].mxu0
      %v1800 = vpop.f32.mrb[0].mxu0
      %v1801 = vadd.f32 %v1697, %v1800
      %v1802 = vpop.f32.mrb[0].mxu0
      %1803 = vmatprep.mubr.bf16.mxu0 0
      %1804 = vmatmul.mubr.bf16.gmra.mrb[0].mxu0 %v1663
      %v1805 = vpop.f32.mrb[0].mxu0
      %v1806 = vadd.f32 %v1697, %v1805
      %v1807 = vpop.f32.mrb[0].mxu0
      %v1808 = vpop.f32.mrb[0].mxu0
      %v1809 = vadd.f32 %v1697, %v1808
      %v1810 = vpop.f32.mrb[0].mxu0
      %1811 = vmatprep.mubr.bf16.mxu0 0
      %1812 = vmatmul.mubr.bf16.gmra.mrb[0].mxu0 %v1664
      %v1813 = vpop.f32.mrb[0].mxu0
      %v1814 = vadd.f32 %v1697, %v1813
      %v1815 = vpop.f32.mrb[0].mxu0
      %v1816 = vpop.f32.mrb[0].mxu0
      %v1817 = vadd.f32 %v1697, %v1816
      %v1818 = vpop.f32.mrb[0].mxu0
      %1819 = vmatprep.mubr.bf16.mxu0 0
      %1820 = vmatmul.mubr.bf16.gmra.mrb[0].mxu0 %v1665
      %v1821 = vpop.f32.mrb[0].mxu0
      %v1822 = vadd.f32 %v1697, %v1821
      %v1823 = vpop.f32.mrb[0].mxu0
      %v1824 = vpop.f32.mrb[0].mxu0
      %v1825 = vadd.f32 %v1697, %v1824
      %v1826 = vpop.f32.mrb[0].mxu0
      %1827 = vmatprep.mubr.bf16.mxu0 0
      %1828 = vmatmul.mubr.bf16.gmra.mrb[0].mxu0 %v1666
      %v1829 = vpop.f32.mrb[0].mxu0
      %v1830 = vadd.f32 %v1697, %v1829
      %v1831 = vpop.f32.mrb[0].mxu0
      %v1832 = vpop.f32.mrb[0].mxu0
      %v1833 = vadd.f32 %v1697, %v1832
      %v1834 = vpop.f32.mrb[0].mxu0
      %1835 = vmatprep.mubr.bf16.mxu0 0
      %1836 = vmatmul.mubr.bf16.gmra.mrb[0].mxu0 %v1667
      %v1837 = vpop.f32.mrb[0].mxu0
      %v1838 = vadd.f32 %v1697, %v1837
      %v1839 = vpop.f32.mrb[0].mxu0
      %v1840 = vpop.f32.mrb[0].mxu0
      %v1841 = vadd.f32 %v1697, %v1840
      %v1842 = vpop.f32.mrb[0].mxu0
      %1843 = vmatprep.mubr.bf16.mxu0 0
      %1844 = vmatmul.mubr.bf16.gmra.mrb[0].mxu0 %v1668
      %v1845 = vpop.f32.mrb[0].mxu0
      %v1846 = vadd.f32 %v1697, %v1845
      %v1847 = vpop.f32.mrb[0].mxu0
      %v1848 = vpop.f32.mrb[0].mxu0
      %v1849 = vadd.f32 %v1697, %v1848
      %v1850 = vpop.f32.mrb[0].mxu0
      %1851 = vmatprep.mubr.bf16.mxu0 0
      %1852 = vmatmul.mubr.bf16.gmra.mrb[0].mxu0 %v1669
      %v1853 = vpop.f32.mrb[0].mxu0
      %v1854 = vadd.f32 %v1697, %v1853
      %v1855 = vpop.f32.mrb[0].mxu0
      %v1856 = vpop.f32.mrb[0].mxu0
      %v1857 = vadd.f32 %v1697, %v1856
      %v1858 = vpop.f32.mrb[0].mxu0
      %1859 = vmatprep.mubr.bf16.mxu0 0
      %1860 = vmatmul.mubr.bf16.gmra.mrb[0].mxu0 %v1670
      %v1861 = vpop.f32.mrb[0].mxu0
      %v1862 = vadd.f32 %v1697, %v1861
      %v1863 = vpop.f32.mrb[0].mxu0
      %v1864 = vpop.f32.mrb[0].mxu0
      %v1865 = vadd.f32 %v1697, %v1864
      %v1866 = vpop.f32.mrb[0].mxu0
      %1867 = vmatprep.mubr.bf16.mxu0 0
      %1868 = vmatmul.mubr.bf16.gmra.mrb[0].mxu0 %v1671
      %v1869 = vpop.f32.mrb[0].mxu0
      %v1870 = vadd.f32 %v1697, %v1869
      %v1871 = vpop.f32.mrb[0].mxu0
      %v1872 = vpop.f32.mrb[0].mxu0
      %v1873 = vadd.f32 %v1697, %v1872
      %v1874 = vpop.f32.mrb[0].mxu0
      %1875 = vmatprep.mubr.bf16.mxu0 0
      %1876 = vmatmul.mubr.bf16.gmra.mrb[0].mxu0 %v1672
      %v1877 = vpop.f32.mrb[0].mxu0
      %v1878 = vadd.f32 %v1697, %v1877
      %v1879 = vpop.f32.mrb[0].mxu0
      %v1880 = vpop.f32.mrb[0].mxu0
      %v1881 = vadd.f32 %v1697, %v1880
      %v1882 = vpop.f32.mrb[0].mxu0
      %1883 = vmatprep.mubr.bf16.mxu0 0
      %1884 = vmatmul.mubr.bf16.gmra.mrb[0].mxu0 %v1673
      %v1885 = vpop.f32.mrb[0].mxu0
      %v1886 = vadd.f32 %v1697, %v1885
      %v1887 = vpop.f32.mrb[0].mxu0
      %v1888 = vpop.f32.mrb[0].mxu0
      %v1889 = vadd.f32 %v1697, %v1888
      %v1890 = vpop.f32.mrb[0].mxu0
      %1891 = vmatprep.mubr.bf16.mxu0 0
      %1892 = vmatmul.mubr.bf16.gmra.mrb[0].mxu0 %v1674
      %v1893 = vpop.f32.mrb[0].mxu0
      %v1894 = vadd.f32 %v1697, %v1893
      %v1895 = vpop.f32.mrb[0].mxu0
      %v1896 = vpop.f32.mrb[0].mxu0
      %v1897 = vadd.f32 %v1697, %v1896
      %v1898 = vpop.f32.mrb[0].mxu0
      %1899 = vmatprep.mubr.bf16.mxu0 0
      %1900 = vmatmul.mubr.bf16.gmra.mrb[0].mxu0 %v1675
      %v1901 = vpop.f32.mrb[0].mxu0
      %v1902 = vadd.f32 %v1697, %v1901
      %v1903 = vpop.f32.mrb[0].mxu0
      %v1904 = vpop.f32.mrb[0].mxu0
      %v1905 = vadd.f32 %v1697, %v1904
      %v1906 = vpop.f32.mrb[0].mxu0
      %1907 = vdwg.mxu0
      %v1908 = vunpack.c.l.bf16 %v280
      %v1909 = vunpack.c.l.bf16 %v281
      %v1910 = vunpack.c.l.bf16 %v282
      %v1911 = vunpack.c.l.bf16 %v283
      %v1912 = vunpack.c.l.bf16 %v284
      %v1913 = vunpack.c.l.bf16 %v285
      %v1914 = vunpack.c.l.bf16 %v286
      %v1915 = vunpack.c.l.bf16 %v287
      %v1916 = vunpack.c.l.bf16 %v288
      %v1917 = vunpack.c.l.bf16 %v289
      %v1918 = vunpack.c.l.bf16 %v290
      %v1919 = vunpack.c.l.bf16 %v291
      %v1920 = vunpack.c.l.bf16 %v292
      %v1921 = vunpack.c.l.bf16 %v293
      %v1922 = vunpack.c.l.bf16 %v294
      %v1923 = vunpack.c.l.bf16 %v295
      %v1924 = vunpack.c.l.bf16 %v296
      %v1925 = vunpack.c.l.bf16 %v297
      %v1926 = vunpack.c.l.bf16 %v298
      %v1927 = vunpack.c.l.bf16 %v299
      %v1928 = vunpack.c.l.bf16 %v300
      %v1929 = vunpack.c.l.bf16 %v301
      %v1930 = vunpack.c.l.bf16 %v302
      %v1931 = vunpack.c.l.bf16 %v303
      %v1932 = vunpack.c.l.bf16 %v304
      %v1933 = vunpack.c.l.bf16 %v305
      %v1934 = vunpack.c.l.bf16 %v306
      %v1935 = vunpack.c.l.bf16 %v307
      %v1936 = vunpack.c.l.bf16 %v308
      %v1937 = vunpack.c.l.bf16 %v309
      %v1938 = vunpack.c.l.bf16 %v310
      %v1939 = vunpack.c.l.bf16 %v311
      %v1940 = vadd.f32 %v1782, %v1908
      %v1941 = vadd.f32 %v1785, %v1909
      %v1942 = vadd.f32 %v1790, %v1910
      %v1943 = vadd.f32 %v1793, %v1911
      %v1944 = vadd.f32 %v1798, %v1912
      %v1945 = vadd.f32 %v1801, %v1913
      %v1946 = vadd.f32 %v1806, %v1914
      %v1947 = vadd.f32 %v1809, %v1915
      %v1948 = vadd.f32 %v1814, %v1916
      %v1949 = vadd.f32 %v1817, %v1917
      %v1950 = vadd.f32 %v1822, %v1918
      %v1951 = vadd.f32 %v1825, %v1919
      %v1952 = vadd.f32 %v1830, %v1920
      %v1953 = vadd.f32 %v1833, %v1921
      %v1954 = vadd.f32 %v1838, %v1922
      %v1955 = vadd.f32 %v1841, %v1923
      %v1956 = vadd.f32 %v1846, %v1924
      %v1957 = vadd.f32 %v1849, %v1925
      %v1958 = vadd.f32 %v1854, %v1926
      %v1959 = vadd.f32 %v1857, %v1927
      %v1960 = vadd.f32 %v1862, %v1928
      %v1961 = vadd.f32 %v1865, %v1929
      %v1962 = vadd.f32 %v1870, %v1930
      %v1963 = vadd.f32 %v1873, %v1931
      %v1964 = vadd.f32 %v1878, %v1932
      %v1965 = vadd.f32 %v1881, %v1933
      %v1966 = vadd.f32 %v1886, %v1934
      %v1967 = vadd.f32 %v1889, %v1935
      %v1968 = vadd.f32 %v1894, %v1936
      %v1969 = vadd.f32 %v1897, %v1937
      %v1970 = vadd.f32 %v1902, %v1938
      %v1971 = vadd.f32 %v1905, %v1939
      %1972 = vst.msk [vmem:[%s278] sm:$0xff] %vm400, %v1940
      %1973 = vst.msk [vmem:[%s278 + $0x8] sm:$0xff] %vm400, %v1941
      %1974 = vst.msk [vmem:[%s278 + $0x10] sm:$0xff] %vm400, %v1942
      %1975 = vst.msk [vmem:[%s278 + $0x18] sm:$0xff] %vm400, %v1943
      %1976 = vst.msk [vmem:[%s278 + $0x20] sm:$0xff] %vm400, %v1944
      %1977 = vst.msk [vmem:[%s278 + $0x28] sm:$0xff] %vm400, %v1945
      %1978 = vst.msk [vmem:[%s278 + $0x30] sm:$0xff] %vm400, %v1946
      %1979 = vst.msk [vmem:[%s278 + $0x38] sm:$0xff] %vm400, %v1947
      %1980 = vst.msk [vmem:[%s278 + $0x40] sm:$0xff] %vm400, %v1948
      %1981 = vst.msk [vmem:[%s278 + $0x48] sm:$0xff] %vm400, %v1949
      %1982 = vst.msk [vmem:[%s278 + $0x50] sm:$0xff] %vm400, %v1950
      %1983 = vst.msk [vmem:[%s278 + $0x58] sm:$0xff] %vm400, %v1951
      %1984 = vst.msk [vmem:[%s278 + $0x60] sm:$0xff] %vm400, %v1952
      %1985 = vst.msk [vmem:[%s278 + $0x68] sm:$0xff] %vm400, %v1953
      %1986 = vst.msk [vmem:[%s278 + $0x70] sm:$0xff] %vm400, %v1954
      %1987 = vst.msk [vmem:[%s278 + $0x78] sm:$0xff] %vm400, %v1955
      %1988 = vst.msk [vmem:[%s278 + $0x80] sm:$0xff] %vm400, %v1956
      %1989 = vst.msk [vmem:[%s278 + $0x88] sm:$0xff] %vm400, %v1957
      %1990 = vst.msk [vmem:[%s278 + $0x90] sm:$0xff] %vm400, %v1958
      %1991 = vst.msk [vmem:[%s278 + $0x98] sm:$0xff] %vm400, %v1959
      %1992 = vst.msk [vmem:[%s278 + $0xa0] sm:$0xff] %vm400, %v1960
      %1993 = vst.msk [vmem:[%s278 + $0xa8] sm:$0xff] %vm400, %v1961
      %1994 = vst.msk [vmem:[%s278 + $0xb0] sm:$0xff] %vm400, %v1962
      %1995 = vst.msk [vmem:[%s278 + $0xb8] sm:$0xff] %vm400, %v1963
      %1996 = vst.msk [vmem:[%s278 + $0xc0] sm:$0xff] %vm400, %v1964
      %1997 = vst.msk [vmem:[%s278 + $0xc8] sm:$0xff] %vm400, %v1965
      %1998 = vst.msk [vmem:[%s278 + $0xd0] sm:$0xff] %vm400, %v1966
      %1999 = vst.msk [vmem:[%s278 + $0xd8] sm:$0xff] %vm400, %v1967
      %2000 = vst.msk [vmem:[%s278 + $0xe0] sm:$0xff] %vm400, %v1968
      %2001 = vst.msk [vmem:[%s278 + $0xe8] sm:$0xff] %vm400, %v1969
      %2002 = vst.msk [vmem:[%s278 + $0xf0] sm:$0xff] %vm400, %v1970
      %2003 = vst.msk [vmem:[%s278 + $0xf8] sm:$0xff] %vm400, %v1971
      %p2004 = scmp.lt.s32.totalorder %s18, 1
      %s2005 = scalar_select %p2004, %s18, 1
      %s2006 = smul.addr %s2005, 32
      %s2007 = smul.addr %s2006, 8
      %s2008 = scalar_lea.vmem %s7, %s2007
      // Predicated region
      $region49: #{inverted_residual.1} parent=47 // pred_check
        %p2009 = pneg %p188
      $region50: #{inverted_residual.1} parent=47 // pred_check_branch
        %2011 = sbr.rel (%p2009) target = $region52
      $region51: #{inverted_residual.1} parent=47 // pred_region
        _
      $region52: #{inverted_residual.1} parent=47 // pred_fallthru
        _
    $region48: #{inverted_residual.1} parent=5 // pred_fallthru
      _
    %p2012 = scmp.le.s32.totalorder 2, %s13
    // Predicated region
    $region53: #{inverted_residual.1} parent=5 // pred_check
      %p2013 = pneg %p2012
    $region54: #{inverted_residual.1} parent=5 // pred_check_branch
      %2015 = sbr.rel (%p2013) target = $region56
    $region55: #{inverted_residual.1} parent=5 // pred_region
      %s2016 = ssub.s32 %s13, 2
      // Predicated region
      $region57: #{inverted_residual.1} parent=55 // pred_check
        %p2017 = pneg %p194
      $region58: #{inverted_residual.1} parent=55 // pred_check_branch
        %2019 = sbr.rel (%p2017) target = $region60
      $region59: #{inverted_residual.1} parent=55 // pred_region
        %p2020 = scmp.lt.s32.totalorder %s19, 1
        %s2021 = scalar_select %p2020, %s19, 1
        %s2022 = smul.addr %s2021, 32
        %s2023 = smul.addr %s2022, 8
        %s2024 = scalar_lea.vmem %s7, %s2023
      $region60: #{inverted_residual.1} parent=55 // pred_fallthru
        _
    $region56: #{inverted_residual.1} parent=5 // pred_fallthru
      _
  $region6: #{inverted_residual.1} parent=0 // loop_footer
    %s17 = sadd.s32 1, %s13
  $region7: #{inverted_residual.1} parent=0 // loop_footer_branch
    %12 = sbr.rel target = $region3
  $region8: #{inverted_residual.1} parent=0 // loop_exit
    _

</llo_original>
